<compile_context>
chip_gen: v5e
topology: v5e:2x2
jax: 0.10.0
libtpu: 0.0.40
codegen_flags: <defaults>
</compile_context>

<pallas_src>
import functools
import math

import jax
import jax.numpy as jnp
from jax.experimental import pallas as pl
from jax.experimental.pallas import tpu as pltpu


# ----------------------------- Pallas kernels ------------------------------

def _block1_kernel(x_ref, g_ref, b_ref, wqkv_ref, bqkv_ref, wo_ref, bo_ref,
                   pool_q_ref, o_ref, *, heads, scale, eps, dot_dtype):
    """Fused LN1 + QKV proj + multi-head attention + out-proj + ScaledResidual
    for one batch element.  Everything stays in VMEM/vregs."""
    x = x_ref[0].astype(jnp.float32)                       # (P, C1)
    P, C1 = x.shape
    d = C1 // heads

    # ---- pre-norm LayerNorm (f32 statistics) ----
    mean = jnp.mean(x, axis=-1, keepdims=True)
    var = jnp.mean(jnp.square(x - mean), axis=-1, keepdims=True)
    xn = (x - mean) * jax.lax.rsqrt(var + eps)
    xn = xn * g_ref[...].astype(jnp.float32) + b_ref[...].astype(jnp.float32)

    # ---- fused QKV projection (pool_q/pool_k/pool_v folded into weights) ----
    qkv = jnp.dot(xn.astype(dot_dtype), wqkv_ref[...].astype(dot_dtype),
                  preferred_element_type=jnp.float32)
    qkv = qkv + bqkv_ref[...].astype(jnp.float32)          # (P, 3*C1)

    # ---- multi-head attention, heads unrolled (static), softmax in f32 ----
    head_outs = []
    for h in range(heads):
        qh = qkv[:, h * d:(h + 1) * d]
        kh = qkv[:, C1 + h * d:C1 + (h + 1) * d]
        vh = qkv[:, 2 * C1 + h * d:2 * C1 + (h + 1) * d]
        s = jax.lax.dot_general(
            qh.astype(dot_dtype), kh.astype(dot_dtype),
            dimension_numbers=(((1,), (1,)), ((), ())),     # q @ k^T
            preferred_element_type=jnp.float32) * scale
        m = jnp.max(s, axis=-1, keepdims=True)
        p = jnp.exp(s - m)
        p = p * pl.reciprocal(jnp.sum(p, axis=-1, keepdims=True), approx=True)
        head_outs.append(jnp.dot(p.astype(dot_dtype), vh.astype(dot_dtype),
                                 preferred_element_type=jnp.float32))
    attn = jnp.concatenate(head_outs, axis=-1)              # (P, C1)

    # ---- out-projection + ScaledResidual (s1 folded into wo/bo);
    #      shortcut = depthwise-1x1 pool_q applied to the raw input x ----
    y = x * pool_q_ref[...].astype(jnp.float32)
    y = y + jnp.dot(attn.astype(dot_dtype), wo_ref[...].astype(dot_dtype),
                    preferred_element_type=jnp.float32)
    y = y + bo_ref[...].astype(jnp.float32)
    o_ref[0] = y.astype(o_ref.dtype)


def _block2_kernel(y_ref, g_ref, b_ref, w1_ref, b1_ref, w2_ref, b2_ref,
                   wsc_ref, bsc_ref, o_ref, *, eps, dot_dtype):
    """Fused Conv1d(c1,c2,1) shortcut + LN2 + W1 + exact GELU + W2 + residual
    for one row tile of tokens.  The (tm, c1*f) hidden never hits HBM."""
    y = y_ref[...].astype(jnp.float32)                      # (tm, C1)

    # shortcut: Conv1d(c1, c2, 1) == per-token linear
    sc = jnp.dot(y.astype(dot_dtype), wsc_ref[...].astype(dot_dtype),
                 preferred_element_type=jnp.float32)
    sc = sc + bsc_ref[...].astype(jnp.float32)

    # pre-norm LayerNorm (f32 statistics)
    mean = jnp.mean(y, axis=-1, keepdims=True)
    var = jnp.mean(jnp.square(y - mean), axis=-1, keepdims=True)
    yn = (y - mean) * jax.lax.rsqrt(var + eps)
    yn = yn * g_ref[...].astype(jnp.float32) + b_ref[...].astype(jnp.float32)

    # ExpansionFCLayer: Linear -> exact erf GELU (f32) -> Linear
    h1 = jnp.dot(yn.astype(dot_dtype), w1_ref[...].astype(dot_dtype),
                 preferred_element_type=jnp.float32)
    h1 = h1 + b1_ref[...].astype(jnp.float32)
    h1 = 0.5 * h1 * (1.0 + jax.lax.erf(h1 * (1.0 / math.sqrt(2.0))))
    mlp = jnp.dot(h1.astype(dot_dtype), w2_ref[...].astype(dot_dtype),
                  preferred_element_type=jnp.float32)
    mlp = mlp + b2_ref[...].astype(jnp.float32)

    # ScaledResidual: res_scale2 already folded into w2/b2
    o_ref[...] = (sc + mlp).astype(o_ref.dtype)


# ------------------------------ tiling helper -------------------------------

def _pick_row_tile(m, cap=1024):
    """Largest power-of-two row tile <= cap dividing m (multiple of 8);
    falls back to the full extent (always legal as a full-dim block)."""
    for tm in (1024, 512, 256, 128, 64, 32, 16, 8):
        if tm <= cap and m % tm == 0:
            return tm
    return m


# ------------------------------- forward -----------------------------------

def transformer_encoder_multiscale(x, params, *, heads, dot_dtype=jnp.bfloat16):
    N, P, C1 = x.shape
    d = C1 // heads
    C2 = params["w_sc"].shape[1]
    hid = params["w1"].shape[1]
    eps = 1e-5

    # ---- trace-time algebraic folding (no extra kernels / HBM passes) ----
    # depthwise 1x1 pool scales folded into the Q/K/V projection weights:
    wq = params["wq"] * params["pool_q_w"][None, :]
    wk = params["wk"] * params["pool_k_w"][None, :]
    wv = params["wv"] * params["pool_v_w"][None, :]
    bq = params["bq"] * params["pool_q_w"]
    bk = params["bk"] * params["pool_k_w"]
    bv = params["bv"] * params["pool_v_w"]
    wqkv = jnp.concatenate([wq, wk, wv], axis=1)                 # (C1, 3*C1)
    bqkv = jnp.concatenate([bq, bk, bv]).reshape(1, 3 * C1)
    # ScaledResidual scales folded into the last matmul of each branch:
    wo = params["res_scale1"] * params["wo"]
    bo = (params["res_scale1"] * params["bo"]).reshape(1, C1)
    w2 = params["res_scale2"] * params["w2"]
    b2 = (params["res_scale2"] * params["b2"]).reshape(1, C2)
    # TODO(synk): general k_q/k_kv, s_q/s_kv depthwise-conv pooling; defaults
    # (kernel=1, stride=1) reduce exactly to the per-channel scales folded above.

    # ---- Block 1: fully fused MSA block, grid over batch ----
    y1 = pl.pallas_call(
        functools.partial(_block1_kernel, heads=heads,
                          scale=1.0 / math.sqrt(d), eps=eps, dot_dtype=dot_dtype),
        out_shape=jax.ShapeDtypeStruct((N, P, C1), x.dtype),
        grid=(N,),
        in_specs=[
            pl.BlockSpec((1, P, C1), lambda i: (i, 0, 0)),       # x
            pl.BlockSpec((1, C1), lambda i: (0, 0)),             # ln1 gamma
            pl.BlockSpec((1, C1), lambda i: (0, 0)),             # ln1 beta
            pl.BlockSpec((C1, 3 * C1), lambda i: (0, 0)),        # Wqkv (pool-folded)
            pl.BlockSpec((1, 3 * C1), lambda i: (0, 0)),         # bqkv
            pl.BlockSpec((C1, C1), lambda i: (0, 0)),            # Wo (s1-folded)
            pl.BlockSpec((1, C1), lambda i: (0, 0)),             # bo
            pl.BlockSpec((1, C1), lambda i: (0, 0)),             # pool_q (shortcut)
        ],
        out_specs=pl.BlockSpec((1, P, C1), lambda i: (i, 0, 0)),
        compiler_params=pltpu.CompilerParams(
            dimension_semantics=("parallel",)),                  # v7x: 2 TCs
    )(x,
      params["ln1_g"].reshape(1, C1), params["ln1_b"].reshape(1, C1),
      wqkv, bqkv, wo, bo, params["pool_q_w"].reshape(1, C1))

    # ---- Block 2: fully fused MLP block, row-tiled over all tokens ----
    M = N * P
    tm = _pick_row_tile(M)
    y1_2d = y1.reshape(M, C1)
    y2 = pl.pallas_call(
        functools.partial(_block2_kernel, eps=eps, dot_dtype=dot_dtype),
        out_shape=jax.ShapeDtypeStruct((M, C2), x.dtype),
        grid=(M // tm,),
        in_specs=[
            pl.BlockSpec((tm, C1), lambda i: (i, 0)),            # y1 tile
            pl.BlockSpec((1, C1), lambda i: (0, 0)),             # ln2 gamma
            pl.BlockSpec((1, C1), lambda i: (0, 0)),             # ln2 beta
            pl.BlockSpec((C1, hid), lambda i: (0, 0)),           # W1
            pl.BlockSpec((1, hid), lambda i: (0, 0)),            # b1
            pl.BlockSpec((hid, C2), lambda i: (0, 0)),           # W2 (s2-folded)
            pl.BlockSpec((1, C2), lambda i: (0, 0)),             # b2
            pl.BlockSpec((C1, C2), lambda i: (0, 0)),            # shortcut Conv1d W
            pl.BlockSpec((1, C2), lambda i: (0, 0)),             # shortcut Conv1d b
        ],
        out_specs=pl.BlockSpec((tm, C2), lambda i: (i, 0)),
        compiler_params=pltpu.CompilerParams(
            dimension_semantics=("parallel",)),
    )(y1_2d,
      params["ln2_g"].reshape(1, C1), params["ln2_b"].reshape(1, C1),
      params["w1"], params["b1"].reshape(1, hid),
      w2, b2,
      params["w_sc"], params["b_sc"].reshape(1, C2))

    return y2.reshape(N, P, C2)


# ----------------------------- param init ----------------------------------

def init_params(key, c1, c2, f, heads):
    hid = c1 * f
    ks = jax.random.split(key, 16)
    s = 0.02

    def rnd(k, shape):
        return (s * jax.random.normal(k, shape)).astype(jnp.float32)

    return {
        # msa.pool_q / pool_k / pool_v : depthwise 1x1 conv weights (per-channel)
        "pool_q_w": 1.0 + rnd(ks[0], (c1,)),
        "pool_k_w": 1.0 + rnd(ks[1], (c1,)),
        "pool_v_w": 1.0 + rnd(ks[2], (c1,)),
        # LN1 (pre-norm of MSA)
        "ln1_g": jnp.ones((c1,), jnp.float32),
        "ln1_b": jnp.zeros((c1,), jnp.float32),
        # q, k, v, out projections
        "wq": rnd(ks[3], (c1, c1)), "bq": jnp.zeros((c1,), jnp.float32),
        "wk": rnd(ks[4], (c1, c1)), "bk": jnp.zeros((c1,), jnp.float32),
        "wv": rnd(ks[5], (c1, c1)), "bv": jnp.zeros((c1,), jnp.float32),
        "wo": rnd(ks[6], (c1, c1)), "bo": jnp.zeros((c1,), jnp.float32),
        # ScaledResidual scales (init 1.0)
        "res_scale1": jnp.float32(1.0),
        "res_scale2": jnp.float32(1.0),
        # mlp shortcut: Conv1d(c1, c2, 1) == per-token linear
        "w_sc": rnd(ks[7], (c1, c2)), "b_sc": jnp.zeros((c2,), jnp.float32),
        # LN2 (pre-norm inside ExpansionFCLayer)
        "ln2_g": jnp.ones((c1,), jnp.float32),
        "ln2_b": jnp.zeros((c1,), jnp.float32),
        # ExpansionFCLayer: c1 -> c1*f -> c2
        "w1": rnd(ks[8], (c1, hid)), "b1": jnp.zeros((hid,), jnp.float32),
        "w2": rnd(ks[9], (hid, c2)), "b2": jnp.zeros((c2,), jnp.float32),
    }


# -------------------------------- main --------------------------------------

if __name__ == "__main__":
    # Small shapes consistent with the module: c1=c2=32, h=w=8 -> P=64, heads=2, f=2.
    N, H, W, C1, C2, HEADS, F = 2, 8, 8, 32, 32, 2, 2
    P = H * W

    key = jax.random.PRNGKey(0)
    kx, kp = jax.random.split(key)
    x = jax.random.normal(kx, (N, P, C1), dtype=jnp.float32)   # 'n (h w) c'
    params = init_params(kp, C1, C2, F, HEADS)

    fwd = jax.jit(functools.partial(transformer_encoder_multiscale, heads=HEADS))
    out = fwd(x, params)
    jax.block_until_ready(out)
    assert out.shape == (N, P, C2), out.shape
    print("KERNEL_OK")
</pallas_src>

<mosaic_0001>
module attributes {stable_mosaic.version = 11 : i64} {
  func.func @_block1_kernel(%arg0: i32, %arg1: memref<1x64x32xf32, #tpu.memory_space<vmem>>, %arg2: memref<1x32xf32, #tpu.memory_space<vmem>>, %arg3: memref<1x32xf32, #tpu.memory_space<vmem>>, %arg4: memref<32x96xf32, #tpu.memory_space<vmem>>, %arg5: memref<1x96xf32, #tpu.memory_space<vmem>>, %arg6: memref<32x32xf32, #tpu.memory_space<vmem>>, %arg7: memref<1x32xf32, #tpu.memory_space<vmem>>, %arg8: memref<1x32xf32, #tpu.memory_space<vmem>>, %arg9: memref<1x64x32xf32, #tpu.memory_space<vmem>>) attributes {dimension_semantics = [#tpu.dimension_semantics<parallel>], iteration_bounds = array<i64: 2>, scalar_prefetch = 0 : i64, scratch_operands = 0 : i64, tpu.core_type = #tpu.core_type<tc>, window_params = [{transform_indices = @transform_0, window_bounds = array<i64: 1, 64, 32>}, {pipeline_mode = #tpu.pipeline_mode<synchronous>, transform_indices = @transform_1, window_bounds = array<i64: 1, 32>}, {pipeline_mode = #tpu.pipeline_mode<synchronous>, transform_indices = @transform_2, window_bounds = array<i64: 1, 32>}, {pipeline_mode = #tpu.pipeline_mode<synchronous>, transform_indices = @transform_3, window_bounds = array<i64: 32, 96>}, {pipeline_mode = #tpu.pipeline_mode<synchronous>, transform_indices = @transform_4, window_bounds = array<i64: 1, 96>}, {pipeline_mode = #tpu.pipeline_mode<synchronous>, transform_indices = @transform_5, window_bounds = array<i64: 32, 32>}, {pipeline_mode = #tpu.pipeline_mode<synchronous>, transform_indices = @transform_6, window_bounds = array<i64: 1, 32>}, {pipeline_mode = #tpu.pipeline_mode<synchronous>, transform_indices = @transform_7, window_bounds = array<i64: 1, 32>}, {transform_indices = @transform_8, window_bounds = array<i64: 1, 64, 32>}]} {
    %c0 = arith.constant 0 : index
    %c0_0 = arith.constant 0 : index
    %c0_1 = arith.constant 0 : index
    %0 = vector.load %arg1[%c0, %c0_0, %c0_1] : memref<1x64x32xf32, #tpu.memory_space<vmem>>, vector<1x64x32xf32>
    %1 = vector.shape_cast %0 : vector<1x64x32xf32> to vector<64x32xf32>
    %cst = arith.constant dense<0.000000e+00> : vector<64xf32>
    %2 = vector.multi_reduction <add>, %1, %cst [1] : vector<64x32xf32> to vector<64xf32>
    %3 = vector.shape_cast %2 : vector<64xf32> to vector<64x1xf32>
    %cst_2 = arith.constant 3.200000e+01 : f32
    %4 = vector.broadcast %cst_2 : f32 to vector<64x1xf32>
    %5 = arith.divf %3, %4 : vector<64x1xf32>
    %6 = vector.broadcast %5 : vector<64x1xf32> to vector<64x32xf32>
    %7 = arith.subf %1, %6 : vector<64x32xf32>
    %8 = arith.mulf %7, %7 : vector<64x32xf32>
    %cst_3 = arith.constant dense<0.000000e+00> : vector<64xf32>
    %9 = vector.multi_reduction <add>, %8, %cst_3 [1] : vector<64x32xf32> to vector<64xf32>
    %10 = vector.shape_cast %9 : vector<64xf32> to vector<64x1xf32>
    %cst_4 = arith.constant 3.200000e+01 : f32
    %11 = vector.broadcast %cst_4 : f32 to vector<64x1xf32>
    %12 = arith.divf %10, %11 : vector<64x1xf32>
    %13 = vector.broadcast %5 : vector<64x1xf32> to vector<64x32xf32>
    %14 = arith.subf %1, %13 : vector<64x32xf32>
    %cst_5 = arith.constant 9.99999974E-6 : f32
    %15 = vector.broadcast %cst_5 : f32 to vector<64x1xf32>
    %16 = arith.addf %12, %15 : vector<64x1xf32>
    %17 = math.rsqrt %16 : vector<64x1xf32>
    %18 = vector.broadcast %17 : vector<64x1xf32> to vector<64x32xf32>
    %19 = arith.mulf %14, %18 : vector<64x32xf32>
    %c0_6 = arith.constant 0 : index
    %c0_7 = arith.constant 0 : index
    %20 = vector.load %arg2[%c0_6, %c0_7] : memref<1x32xf32, #tpu.memory_space<vmem>>, vector<1x32xf32>
    %21 = vector.broadcast %20 : vector<1x32xf32> to vector<64x32xf32>
    %22 = arith.mulf %19, %21 : vector<64x32xf32>
    %c0_8 = arith.constant 0 : index
    %c0_9 = arith.constant 0 : index
    %23 = vector.load %arg3[%c0_8, %c0_9] : memref<1x32xf32, #tpu.memory_space<vmem>>, vector<1x32xf32>
    %24 = vector.broadcast %23 : vector<1x32xf32> to vector<64x32xf32>
    %25 = arith.addf %22, %24 : vector<64x32xf32>
    %26 = arith.truncf %25 : vector<64x32xf32> to vector<64x32xbf16>
    %c0_10 = arith.constant 0 : index
    %c0_11 = arith.constant 0 : index
    %27 = vector.load %arg4[%c0_10, %c0_11] : memref<32x96xf32, #tpu.memory_space<vmem>>, vector<32x96xf32>
    %28 = arith.truncf %27 : vector<32x96xf32> to vector<32x96xbf16>
    %cst_12 = arith.constant dense<0.000000e+00> : vector<64x96xf32>
    %29 = tpu.matmul %26, %28, %cst_12 {dimension_numbers = #tpu.dot_dimension_numbers<[1], [0], [0], [1], [0, 0, 1, 1], [], []>} : vector<64x32xbf16>, vector<32x96xbf16>, vector<64x96xf32> -> vector<64x96xf32>
    %c0_13 = arith.constant 0 : index
    %c0_14 = arith.constant 0 : index
    %30 = vector.load %arg5[%c0_13, %c0_14] : memref<1x96xf32, #tpu.memory_space<vmem>>, vector<1x96xf32>
    %31 = vector.broadcast %30 : vector<1x96xf32> to vector<64x96xf32>
    %32 = arith.addf %29, %31 : vector<64x96xf32>
    %33 = vector.extract_strided_slice %32 {offsets = [0, 0], sizes = [64, 16], strides = [1, 1]} : vector<64x96xf32> to vector<64x16xf32>
    %34 = vector.extract_strided_slice %32 {offsets = [0, 32], sizes = [64, 16], strides = [1, 1]} : vector<64x96xf32> to vector<64x16xf32>
    %35 = vector.extract_strided_slice %32 {offsets = [0, 64], sizes = [64, 16], strides = [1, 1]} : vector<64x96xf32> to vector<64x16xf32>
    %36 = arith.truncf %33 : vector<64x16xf32> to vector<64x16xbf16>
    %37 = arith.truncf %34 : vector<64x16xf32> to vector<64x16xbf16>
    %cst_15 = arith.constant dense<0.000000e+00> : vector<64x64xf32>
    %38 = tpu.matmul %36, %37, %cst_15 {dimension_numbers = #tpu.dot_dimension_numbers<[1], [1], [0], [0], [0, 0, 1, 0], [], []>} : vector<64x16xbf16>, vector<64x16xbf16>, vector<64x64xf32> -> vector<64x64xf32>
    %cst_16 = arith.constant 2.500000e-01 : f32
    %39 = vector.broadcast %cst_16 : f32 to vector<64x64xf32>
    %40 = arith.mulf %38, %39 : vector<64x64xf32>
    %cst_17 = arith.constant dense<0xFF800000> : vector<64xf32>
    %41 = vector.multi_reduction <maximumf>, %40, %cst_17 [1] : vector<64x64xf32> to vector<64xf32>
    %42 = vector.shape_cast %41 : vector<64xf32> to vector<64x1xf32>
    %43 = vector.broadcast %42 : vector<64x1xf32> to vector<64x64xf32>
    %44 = arith.subf %40, %43 : vector<64x64xf32>
    %45 = math.exp %44 : vector<64x64xf32>
    %cst_18 = arith.constant dense<0.000000e+00> : vector<64xf32>
    %46 = vector.multi_reduction <add>, %45, %cst_18 [1] : vector<64x64xf32> to vector<64xf32>
    %47 = vector.shape_cast %46 : vector<64xf32> to vector<64x1xf32>
    %48 = tpu.reciprocal %47 {approx = true} : vector<64x1xf32> -> vector<64x1xf32>
    %49 = vector.broadcast %48 : vector<64x1xf32> to vector<64x64xf32>
    %50 = arith.mulf %45, %49 : vector<64x64xf32>
    %51 = arith.truncf %50 : vector<64x64xf32> to vector<64x64xbf16>
    %52 = arith.truncf %35 : vector<64x16xf32> to vector<64x16xbf16>
    %cst_19 = arith.constant dense<0.000000e+00> : vector<64x16xf32>
    %53 = tpu.matmul %51, %52, %cst_19 {dimension_numbers = #tpu.dot_dimension_numbers<[1], [0], [0], [1], [0, 0, 1, 1], [], []>} : vector<64x64xbf16>, vector<64x16xbf16>, vector<64x16xf32> -> vector<64x16xf32>
    %54 = vector.extract_strided_slice %32 {offsets = [0, 16], sizes = [64, 16], strides = [1, 1]} : vector<64x96xf32> to vector<64x16xf32>
    %55 = vector.extract_strided_slice %32 {offsets = [0, 48], sizes = [64, 16], strides = [1, 1]} : vector<64x96xf32> to vector<64x16xf32>
    %56 = vector.extract_strided_slice %32 {offsets = [0, 80], sizes = [64, 16], strides = [1, 1]} : vector<64x96xf32> to vector<64x16xf32>
    %57 = arith.truncf %54 : vector<64x16xf32> to vector<64x16xbf16>
    %58 = arith.truncf %55 : vector<64x16xf32> to vector<64x16xbf16>
    %cst_20 = arith.constant dense<0.000000e+00> : vector<64x64xf32>
    %59 = tpu.matmul %57, %58, %cst_20 {dimension_numbers = #tpu.dot_dimension_numbers<[1], [1], [0], [0], [0, 0, 1, 0], [], []>} : vector<64x16xbf16>, vector<64x16xbf16>, vector<64x64xf32> -> vector<64x64xf32>
    %cst_21 = arith.constant 2.500000e-01 : f32
    %60 = vector.broadcast %cst_21 : f32 to vector<64x64xf32>
    %61 = arith.mulf %59, %60 : vector<64x64xf32>
    %cst_22 = arith.constant dense<0xFF800000> : vector<64xf32>
    %62 = vector.multi_reduction <maximumf>, %61, %cst_22 [1] : vector<64x64xf32> to vector<64xf32>
    %63 = vector.shape_cast %62 : vector<64xf32> to vector<64x1xf32>
    %64 = vector.broadcast %63 : vector<64x1xf32> to vector<64x64xf32>
    %65 = arith.subf %61, %64 : vector<64x64xf32>
    %66 = math.exp %65 : vector<64x64xf32>
    %cst_23 = arith.constant dense<0.000000e+00> : vector<64xf32>
    %67 = vector.multi_reduction <add>, %66, %cst_23 [1] : vector<64x64xf32> to vector<64xf32>
    %68 = vector.shape_cast %67 : vector<64xf32> to vector<64x1xf32>
    %69 = tpu.reciprocal %68 {approx = true} : vector<64x1xf32> -> vector<64x1xf32>
    %70 = vector.broadcast %69 : vector<64x1xf32> to vector<64x64xf32>
    %71 = arith.mulf %66, %70 : vector<64x64xf32>
    %72 = arith.truncf %71 : vector<64x64xf32> to vector<64x64xbf16>
    %73 = arith.truncf %56 : vector<64x16xf32> to vector<64x16xbf16>
    %cst_24 = arith.constant dense<0.000000e+00> : vector<64x16xf32>
    %74 = tpu.matmul %72, %73, %cst_24 {dimension_numbers = #tpu.dot_dimension_numbers<[1], [0], [0], [1], [0, 0, 1, 1], [], []>} : vector<64x64xbf16>, vector<64x16xbf16>, vector<64x16xf32> -> vector<64x16xf32>
    %75 = tpu.concatenate %53, %74 in 1 : vector<64x16xf32>, vector<64x16xf32> -> vector<64x32xf32>
    %c0_25 = arith.constant 0 : index
    %c0_26 = arith.constant 0 : index
    %76 = vector.load %arg8[%c0_25, %c0_26] : memref<1x32xf32, #tpu.memory_space<vmem>>, vector<1x32xf32>
    %77 = vector.broadcast %76 : vector<1x32xf32> to vector<64x32xf32>
    %78 = arith.mulf %1, %77 : vector<64x32xf32>
    %79 = arith.truncf %75 : vector<64x32xf32> to vector<64x32xbf16>
    %c0_27 = arith.constant 0 : index
    %c0_28 = arith.constant 0 : index
    %80 = vector.load %arg6[%c0_27, %c0_28] : memref<32x32xf32, #tpu.memory_space<vmem>>, vector<32x32xf32>
    %81 = arith.truncf %80 : vector<32x32xf32> to vector<32x32xbf16>
    %cst_29 = arith.constant dense<0.000000e+00> : vector<64x32xf32>
    %82 = tpu.matmul %79, %81, %cst_29 {dimension_numbers = #tpu.dot_dimension_numbers<[1], [0], [0], [1], [0, 0, 1, 1], [], []>} : vector<64x32xbf16>, vector<32x32xbf16>, vector<64x32xf32> -> vector<64x32xf32>
    %83 = arith.addf %78, %82 : vector<64x32xf32>
    %c0_30 = arith.constant 0 : index
    %c0_31 = arith.constant 0 : index
    %84 = vector.load %arg7[%c0_30, %c0_31] : memref<1x32xf32, #tpu.memory_space<vmem>>, vector<1x32xf32>
    %85 = vector.broadcast %84 : vector<1x32xf32> to vector<64x32xf32>
    %86 = arith.addf %83, %85 : vector<64x32xf32>
    %c0_32 = arith.constant 0 : index
    %c0_33 = arith.constant 0 : index
    %c0_34 = arith.constant 0 : index
    %87 = vector.load %arg9[%c0_32, %c0_33, %c0_34] : memref<1x64x32xf32, #tpu.memory_space<vmem>>, vector<1x64x32xf32>
    %88 = vector.shape_cast %87 : vector<1x64x32xf32> to vector<64x32xf32>
    %89 = vector.shape_cast %86 : vector<64x32xf32> to vector<1x64x32xf32>
    tpu.vector_store %arg9[%c0_32, %c0_33, %c0_34], %89 {strides = array<i32>} : memref<1x64x32xf32, #tpu.memory_space<vmem>>, vector<1x64x32xf32>,
    return
  }
  func.func @transform_0(%arg0: i32) -> (i32, i32, i32) {
    %c0_i32 = arith.constant 0 : i32
    %c0_i32_0 = arith.constant 0 : i32
    %c0_i32_1 = arith.constant 0 : i32
    return %arg0, %c0_i32, %c0_i32_0 : i32, i32, i32
  }
  func.func @transform_1(%arg0: i32) -> (i32, i32) {
    %c0_i32 = arith.constant 0 : i32
    %c0_i32_0 = arith.constant 0 : i32
    %c0_i32_1 = arith.constant 0 : i32
    return %c0_i32, %c0_i32_0 : i32, i32
  }
  func.func @transform_2(%arg0: i32) -> (i32, i32) {
    %c0_i32 = arith.constant 0 : i32
    %c0_i32_0 = arith.constant 0 : i32
    %c0_i32_1 = arith.constant 0 : i32
    return %c0_i32, %c0_i32_0 : i32, i32
  }
  func.func @transform_3(%arg0: i32) -> (i32, i32) {
    %c0_i32 = arith.constant 0 : i32
    %c0_i32_0 = arith.constant 0 : i32
    %c0_i32_1 = arith.constant 0 : i32
    return %c0_i32, %c0_i32_0 : i32, i32
  }
  func.func @transform_4(%arg0: i32) -> (i32, i32) {
    %c0_i32 = arith.constant 0 : i32
    %c0_i32_0 = arith.constant 0 : i32
    %c0_i32_1 = arith.constant 0 : i32
    return %c0_i32, %c0_i32_0 : i32, i32
  }
  func.func @transform_5(%arg0: i32) -> (i32, i32) {
    %c0_i32 = arith.constant 0 : i32
    %c0_i32_0 = arith.constant 0 : i32
    %c0_i32_1 = arith.constant 0 : i32
    return %c0_i32, %c0_i32_0 : i32, i32
  }
  func.func @transform_6(%arg0: i32) -> (i32, i32) {
    %c0_i32 = arith.constant 0 : i32
    %c0_i32_0 = arith.constant 0 : i32
    %c0_i32_1 = arith.constant 0 : i32
    return %c0_i32, %c0_i32_0 : i32, i32
  }
  func.func @transform_7(%arg0: i32) -> (i32, i32) {
    %c0_i32 = arith.constant 0 : i32
    %c0_i32_0 = arith.constant 0 : i32
    %c0_i32_1 = arith.constant 0 : i32
    return %c0_i32, %c0_i32_0 : i32, i32
  }
  func.func @transform_8(%arg0: i32) -> (i32, i32, i32) {
    %c0_i32 = arith.constant 0 : i32
    %c0_i32_0 = arith.constant 0 : i32
    %c0_i32_1 = arith.constant 0 : i32
    return %arg0, %c0_i32, %c0_i32_0 : i32, i32, i32
  }
}

module attributes {stable_mosaic.version = 11 : i64} {
  func.func @_block2_kernel(%arg0: i32, %arg1: memref<128x32xf32, #tpu.memory_space<vmem>>, %arg2: memref<1x32xf32, #tpu.memory_space<vmem>>, %arg3: memref<1x32xf32, #tpu.memory_space<vmem>>, %arg4: memref<32x64xf32, #tpu.memory_space<vmem>>, %arg5: memref<1x64xf32, #tpu.memory_space<vmem>>, %arg6: memref<64x32xf32, #tpu.memory_space<vmem>>, %arg7: memref<1x32xf32, #tpu.memory_space<vmem>>, %arg8: memref<32x32xf32, #tpu.memory_space<vmem>>, %arg9: memref<1x32xf32, #tpu.memory_space<vmem>>, %arg10: memref<128x32xf32, #tpu.memory_space<vmem>>) attributes {dimension_semantics = [#tpu.dimension_semantics<parallel>], iteration_bounds = array<i64: 1>, scalar_prefetch = 0 : i64, scratch_operands = 0 : i64, tpu.core_type = #tpu.core_type<tc>, window_params = [{transform_indices = @transform_0, window_bounds = array<i64: 128, 32>}, {pipeline_mode = #tpu.pipeline_mode<synchronous>, transform_indices = @transform_1, window_bounds = array<i64: 1, 32>}, {pipeline_mode = #tpu.pipeline_mode<synchronous>, transform_indices = @transform_2, window_bounds = array<i64: 1, 32>}, {pipeline_mode = #tpu.pipeline_mode<synchronous>, transform_indices = @transform_3, window_bounds = array<i64: 32, 64>}, {pipeline_mode = #tpu.pipeline_mode<synchronous>, transform_indices = @transform_4, window_bounds = array<i64: 1, 64>}, {pipeline_mode = #tpu.pipeline_mode<synchronous>, transform_indices = @transform_5, window_bounds = array<i64: 64, 32>}, {pipeline_mode = #tpu.pipeline_mode<synchronous>, transform_indices = @transform_6, window_bounds = array<i64: 1, 32>}, {pipeline_mode = #tpu.pipeline_mode<synchronous>, transform_indices = @transform_7, window_bounds = array<i64: 32, 32>}, {pipeline_mode = #tpu.pipeline_mode<synchronous>, transform_indices = @transform_8, window_bounds = array<i64: 1, 32>}, {transform_indices = @transform_9, window_bounds = array<i64: 128, 32>}]} {
    %c0 = arith.constant 0 : index
    %c0_0 = arith.constant 0 : index
    %0 = vector.load %arg1[%c0, %c0_0] : memref<128x32xf32, #tpu.memory_space<vmem>>, vector<128x32xf32>
    %1 = arith.truncf %0 : vector<128x32xf32> to vector<128x32xbf16>
    %c0_1 = arith.constant 0 : index
    %c0_2 = arith.constant 0 : index
    %2 = vector.load %arg8[%c0_1, %c0_2] : memref<32x32xf32, #tpu.memory_space<vmem>>, vector<32x32xf32>
    %3 = arith.truncf %2 : vector<32x32xf32> to vector<32x32xbf16>
    %cst = arith.constant dense<0.000000e+00> : vector<128x32xf32>
    %4 = tpu.matmul %1, %3, %cst {dimension_numbers = #tpu.dot_dimension_numbers<[1], [0], [0], [1], [0, 0, 1, 1], [], []>} : vector<128x32xbf16>, vector<32x32xbf16>, vector<128x32xf32> -> vector<128x32xf32>
    %c0_3 = arith.constant 0 : index
    %c0_4 = arith.constant 0 : index
    %5 = vector.load %arg9[%c0_3, %c0_4] : memref<1x32xf32, #tpu.memory_space<vmem>>, vector<1x32xf32>
    %6 = vector.broadcast %5 : vector<1x32xf32> to vector<128x32xf32>
    %7 = arith.addf %4, %6 : vector<128x32xf32>
    %cst_5 = arith.constant dense<0.000000e+00> : vector<128xf32>
    %8 = vector.multi_reduction <add>, %0, %cst_5 [1] : vector<128x32xf32> to vector<128xf32>
    %9 = vector.shape_cast %8 : vector<128xf32> to vector<128x1xf32>
    %cst_6 = arith.constant 3.200000e+01 : f32
    %10 = vector.broadcast %cst_6 : f32 to vector<128x1xf32>
    %11 = arith.divf %9, %10 : vector<128x1xf32>
    %12 = vector.broadcast %11 : vector<128x1xf32> to vector<128x32xf32>
    %13 = arith.subf %0, %12 : vector<128x32xf32>
    %14 = arith.mulf %13, %13 : vector<128x32xf32>
    %cst_7 = arith.constant dense<0.000000e+00> : vector<128xf32>
    %15 = vector.multi_reduction <add>, %14, %cst_7 [1] : vector<128x32xf32> to vector<128xf32>
    %16 = vector.shape_cast %15 : vector<128xf32> to vector<128x1xf32>
    %cst_8 = arith.constant 3.200000e+01 : f32
    %17 = vector.broadcast %cst_8 : f32 to vector<128x1xf32>
    %18 = arith.divf %16, %17 : vector<128x1xf32>
    %19 = vector.broadcast %11 : vector<128x1xf32> to vector<128x32xf32>
    %20 = arith.subf %0, %19 : vector<128x32xf32>
    %cst_9 = arith.constant 9.99999974E-6 : f32
    %21 = vector.broadcast %cst_9 : f32 to vector<128x1xf32>
    %22 = arith.addf %18, %21 : vector<128x1xf32>
    %23 = math.rsqrt %22 : vector<128x1xf32>
    %24 = vector.broadcast %23 : vector<128x1xf32> to vector<128x32xf32>
    %25 = arith.mulf %20, %24 : vector<128x32xf32>
    %c0_10 = arith.constant 0 : index
    %c0_11 = arith.constant 0 : index
    %26 = vector.load %arg2[%c0_10, %c0_11] : memref<1x32xf32, #tpu.memory_space<vmem>>, vector<1x32xf32>
    %27 = vector.broadcast %26 : vector<1x32xf32> to vector<128x32xf32>
    %28 = arith.mulf %25, %27 : vector<128x32xf32>
    %c0_12 = arith.constant 0 : index
    %c0_13 = arith.constant 0 : index
    %29 = vector.load %arg3[%c0_12, %c0_13] : memref<1x32xf32, #tpu.memory_space<vmem>>, vector<1x32xf32>
    %30 = vector.broadcast %29 : vector<1x32xf32> to vector<128x32xf32>
    %31 = arith.addf %28, %30 : vector<128x32xf32>
    %32 = arith.truncf %31 : vector<128x32xf32> to vector<128x32xbf16>
    %c0_14 = arith.constant 0 : index
    %c0_15 = arith.constant 0 : index
    %33 = vector.load %arg4[%c0_14, %c0_15] : memref<32x64xf32, #tpu.memory_space<vmem>>, vector<32x64xf32>
    %34 = arith.truncf %33 : vector<32x64xf32> to vector<32x64xbf16>
    %cst_16 = arith.constant dense<0.000000e+00> : vector<128x64xf32>
    %35 = tpu.matmul %32, %34, %cst_16 {dimension_numbers = #tpu.dot_dimension_numbers<[1], [0], [0], [1], [0, 0, 1, 1], [], []>} : vector<128x32xbf16>, vector<32x64xbf16>, vector<128x64xf32> -> vector<128x64xf32>
    %c0_17 = arith.constant 0 : index
    %c0_18 = arith.constant 0 : index
    %36 = vector.load %arg5[%c0_17, %c0_18] : memref<1x64xf32, #tpu.memory_space<vmem>>, vector<1x64xf32>
    %37 = vector.broadcast %36 : vector<1x64xf32> to vector<128x64xf32>
    %38 = arith.addf %35, %37 : vector<128x64xf32>
    %cst_19 = arith.constant 5.000000e-01 : f32
    %39 = vector.broadcast %cst_19 : f32 to vector<128x64xf32>
    %40 = arith.mulf %39, %38 : vector<128x64xf32>
    %cst_20 = arith.constant 0.707106769 : f32
    %41 = vector.broadcast %cst_20 : f32 to vector<128x64xf32>
    %42 = arith.mulf %38, %41 : vector<128x64xf32>
    %43 = math.erf %42 : vector<128x64xf32>
    %cst_21 = arith.constant 1.000000e+00 : f32
    %44 = vector.broadcast %cst_21 : f32 to vector<128x64xf32>
    %45 = arith.addf %44, %43 : vector<128x64xf32>
    %46 = arith.mulf %40, %45 : vector<128x64xf32>
    %47 = arith.truncf %46 : vector<128x64xf32> to vector<128x64xbf16>
    %c0_22 = arith.constant 0 : index
    %c0_23 = arith.constant 0 : index
    %48 = vector.load %arg6[%c0_22, %c0_23] : memref<64x32xf32, #tpu.memory_space<vmem>>, vector<64x32xf32>
    %49 = arith.truncf %48 : vector<64x32xf32> to vector<64x32xbf16>
    %cst_24 = arith.constant dense<0.000000e+00> : vector<128x32xf32>
    %50 = tpu.matmul %47, %49, %cst_24 {dimension_numbers = #tpu.dot_dimension_numbers<[1], [0], [0], [1], [0, 0, 1, 1], [], []>} : vector<128x64xbf16>, vector<64x32xbf16>, vector<128x32xf32> -> vector<128x32xf32>
    %c0_25 = arith.constant 0 : index
    %c0_26 = arith.constant 0 : index
    %51 = vector.load %arg7[%c0_25, %c0_26] : memref<1x32xf32, #tpu.memory_space<vmem>>, vector<1x32xf32>
    %52 = vector.broadcast %51 : vector<1x32xf32> to vector<128x32xf32>
    %53 = arith.addf %50, %52 : vector<128x32xf32>
    %54 = arith.addf %7, %53 : vector<128x32xf32>
    %c0_27 = arith.constant 0 : index
    %c0_28 = arith.constant 0 : index
    %55 = vector.load %arg10[%c0_27, %c0_28] : memref<128x32xf32, #tpu.memory_space<vmem>>, vector<128x32xf32>
    tpu.vector_store %arg10[%c0_27, %c0_28], %54 {strides = array<i32>} : memref<128x32xf32, #tpu.memory_space<vmem>>, vector<128x32xf32>,
    return
  }
  func.func @transform_0(%arg0: i32) -> (i32, i32) {
    %c0_i32 = arith.constant 0 : i32
    %c0_i32_0 = arith.constant 0 : i32
    return %arg0, %c0_i32 : i32, i32
  }
  func.func @transform_1(%arg0: i32) -> (i32, i32) {
    %c0_i32 = arith.constant 0 : i32
    %c0_i32_0 = arith.constant 0 : i32
    %c0_i32_1 = arith.constant 0 : i32
    return %c0_i32, %c0_i32_0 : i32, i32
  }
  func.func @transform_2(%arg0: i32) -> (i32, i32) {
    %c0_i32 = arith.constant 0 : i32
    %c0_i32_0 = arith.constant 0 : i32
    %c0_i32_1 = arith.constant 0 : i32
    return %c0_i32, %c0_i32_0 : i32, i32
  }
  func.func @transform_3(%arg0: i32) -> (i32, i32) {
    %c0_i32 = arith.constant 0 : i32
    %c0_i32_0 = arith.constant 0 : i32
    %c0_i32_1 = arith.constant 0 : i32
    return %c0_i32, %c0_i32_0 : i32, i32
  }
  func.func @transform_4(%arg0: i32) -> (i32, i32) {
    %c0_i32 = arith.constant 0 : i32
    %c0_i32_0 = arith.constant 0 : i32
    %c0_i32_1 = arith.constant 0 : i32
    return %c0_i32, %c0_i32_0 : i32, i32
  }
  func.func @transform_5(%arg0: i32) -> (i32, i32) {
    %c0_i32 = arith.constant 0 : i32
    %c0_i32_0 = arith.constant 0 : i32
    %c0_i32_1 = arith.constant 0 : i32
    return %c0_i32, %c0_i32_0 : i32, i32
  }
  func.func @transform_6(%arg0: i32) -> (i32, i32) {
    %c0_i32 = arith.constant 0 : i32
    %c0_i32_0 = arith.constant 0 : i32
    %c0_i32_1 = arith.constant 0 : i32
    return %c0_i32, %c0_i32_0 : i32, i32
  }
  func.func @transform_7(%arg0: i32) -> (i32, i32) {
    %c0_i32 = arith.constant 0 : i32
    %c0_i32_0 = arith.constant 0 : i32
    %c0_i32_1 = arith.constant 0 : i32
    return %c0_i32, %c0_i32_0 : i32, i32
  }
  func.func @transform_8(%arg0: i32) -> (i32, i32) {
    %c0_i32 = arith.constant 0 : i32
    %c0_i32_0 = arith.constant 0 : i32
    %c0_i32_1 = arith.constant 0 : i32
    return %c0_i32, %c0_i32_0 : i32, i32
  }
  func.func @transform_9(%arg0: i32) -> (i32, i32) {
    %c0_i32 = arith.constant 0 : i32
    %c0_i32_0 = arith.constant 0 : i32
    return %arg0, %c0_i32 : i32, i32
  }
}

</mosaic_0001>

<llo_original>
// kernel: mul.35
$region0: #{mul.35}
  #allocation0 [shape = 's32[1]{0}', space=sflag, size = 0x4, scoped, tag = 'scoped memory for mul.35']
  %s0 = inlined_call_operand.vmem [shape: f32[32], index: 0, kind: input, shape index: {}]
  %s1 = inlined_call_operand.vmem [shape: f32[32], index: 1, kind: input, shape index: {}]
  %s2 = inlined_call_operand.vmem [shape: f32[32], index: 2, kind: output, shape index: {}]
  %v3 = vld [vmem:[%s0] sm:$0x1]
  %v4 = vld [vmem:[%s1] sm:$0x1]
  %5 = xla_tuple %v3, %v4
  %6 = xla_tuple %5
  %v7 = vmul.f32 %v3, %v4
  %8 = xla_tuple %v7
  %9 = vst [vmem:[%s2] sm:$0x1] %v7

// kernel: transformer_encoder_multiscale.3
$region0: #{transformer_encoder_multiscale.3}
  #allocation0 [shape = 'u32[]', space=smem, size = 0x4, offset = 0x4, fixed_abs, tag = 'smem constant byte address 0x4 - core index']
  #allocation1 [shape = 'u32[72,128]{1,0:T(1,128)}', space=vmem, size = 0x9000, scoped, tag = 'internal scratch']
  %s0 = inlined_call_operand.vmem [shape: f32[128,32], index: 0, kind: input, shape index: {}]
  %s1 = inlined_call_operand.vmem [shape: f32[1,32], index: 1, kind: input, shape index: {}]
  %s2 = inlined_call_operand.vmem [shape: f32[1,32], index: 2, kind: input, shape index: {}]
  %s3 = inlined_call_operand.vmem [shape: f32[32,64], index: 3, kind: input, shape index: {}]
  %s4 = inlined_call_operand.vmem [shape: f32[1,64], index: 4, kind: input, shape index: {}]
  %s5 = inlined_call_operand.vmem [shape: f32[64,32], index: 5, kind: input, shape index: {}]
  %s6 = inlined_call_operand.vmem [shape: f32[1,32], index: 6, kind: input, shape index: {}]
  %s7 = inlined_call_operand.vmem [shape: f32[32,32], index: 7, kind: input, shape index: {}]
  %s8 = inlined_call_operand.vmem [shape: f32[1,32], index: 8, kind: input, shape index: {}]
  %s9 = inlined_call_operand.vmem [shape: f32[128,32], index: 9, kind: output, shape index: {}]
  %s10 = sld [smem:[#allocation0]]
  $region46: #{transformer_encoder_multiscale.3} parent=0
    _
  %s12 = ssub.s32 1, %s10
  %s13 = scalar_select 0, %s12, %s10
  // Predicated region
  $region2: #{transformer_encoder_multiscale.3} parent=0 // pred_check
    _
  $region3: #{transformer_encoder_multiscale.3} parent=0 // pred_check_branch
    %15 = sbr.rel (0) target = $region5
  $region4: #{transformer_encoder_multiscale.3} parent=0 // pred_region
    _
  $region5: #{transformer_encoder_multiscale.3} parent=0 // pred_fallthru
    _
  // Predicated region
  $region6: #{transformer_encoder_multiscale.3} parent=0 // pred_check
    _
  $region7: #{transformer_encoder_multiscale.3} parent=0 // pred_check_branch
    %17 = sbr.rel (0) target = $region9
  $region8: #{transformer_encoder_multiscale.3} parent=0 // pred_region
    _
  $region9: #{transformer_encoder_multiscale.3} parent=0 // pred_fallthru
    _
  // Predicated region
  $region10: #{transformer_encoder_multiscale.3} parent=0 // pred_check
    _
  $region11: #{transformer_encoder_multiscale.3} parent=0 // pred_check_branch
    %19 = sbr.rel (0) target = $region13
  $region12: #{transformer_encoder_multiscale.3} parent=0 // pred_region
    _
  $region13: #{transformer_encoder_multiscale.3} parent=0 // pred_fallthru
    _
  // Predicated region
  $region14: #{transformer_encoder_multiscale.3} parent=0 // pred_check
    _
  $region15: #{transformer_encoder_multiscale.3} parent=0 // pred_check_branch
    %21 = sbr.rel (0) target = $region17
  $region16: #{transformer_encoder_multiscale.3} parent=0 // pred_region
    _
  $region17: #{transformer_encoder_multiscale.3} parent=0 // pred_fallthru
    _
  // Predicated region
  $region18: #{transformer_encoder_multiscale.3} parent=0 // pred_check
    _
  $region19: #{transformer_encoder_multiscale.3} parent=0 // pred_check_branch
    %23 = sbr.rel (0) target = $region21
  $region20: #{transformer_encoder_multiscale.3} parent=0 // pred_region
    _
  $region21: #{transformer_encoder_multiscale.3} parent=0 // pred_fallthru
    _
  // Predicated region
  $region22: #{transformer_encoder_multiscale.3} parent=0 // pred_check
    _
  $region23: #{transformer_encoder_multiscale.3} parent=0 // pred_check_branch
    %25 = sbr.rel (0) target = $region25
  $region24: #{transformer_encoder_multiscale.3} parent=0 // pred_region
    _
  $region25: #{transformer_encoder_multiscale.3} parent=0 // pred_fallthru
    _
  // Predicated region
  $region26: #{transformer_encoder_multiscale.3} parent=0 // pred_check
    _
  $region27: #{transformer_encoder_multiscale.3} parent=0 // pred_check_branch
    %27 = sbr.rel (0) target = $region29
  $region28: #{transformer_encoder_multiscale.3} parent=0 // pred_region
    _
  $region29: #{transformer_encoder_multiscale.3} parent=0 // pred_fallthru
    _
  // Predicated region
  $region30: #{transformer_encoder_multiscale.3} parent=0 // pred_check
    _
  $region31: #{transformer_encoder_multiscale.3} parent=0 // pred_check_branch
    %29 = sbr.rel (0) target = $region33
  $region32: #{transformer_encoder_multiscale.3} parent=0 // pred_region
    _
  $region33: #{transformer_encoder_multiscale.3} parent=0 // pred_fallthru
    _
  // Predicated region
  $region34: #{transformer_encoder_multiscale.3} parent=0 // pred_check
    _
  $region35: #{transformer_encoder_multiscale.3} parent=0 // pred_check_branch
    %31 = sbr.rel (0) target = $region37
  $region36: #{transformer_encoder_multiscale.3} parent=0 // pred_region
    _
  $region37: #{transformer_encoder_multiscale.3} parent=0 // pred_fallthru
    _
  %v33 = vld [vmem:[%s0] sm:$0xff]
  %v34 = vld [vmem:[%s0 + $0x8] sm:$0xff]
  %v35 = vld [vmem:[%s0 + $0x10] sm:$0xff]
  %v36 = vld [vmem:[%s0 + $0x18] sm:$0xff]
  %v37 = vld [vmem:[%s0 + $0x20] sm:$0xff]
  %v38 = vld [vmem:[%s0 + $0x28] sm:$0xff]
  %v39 = vld [vmem:[%s0 + $0x30] sm:$0xff]
  %v40 = vld [vmem:[%s0 + $0x38] sm:$0xff]
  %v41 = vld [vmem:[%s0 + $0x40] sm:$0xff]
  %v42 = vld [vmem:[%s0 + $0x48] sm:$0xff]
  %v43 = vld [vmem:[%s0 + $0x50] sm:$0xff]
  %v44 = vld [vmem:[%s0 + $0x58] sm:$0xff]
  %v45 = vld [vmem:[%s0 + $0x60] sm:$0xff]
  %v46 = vld [vmem:[%s0 + $0x68] sm:$0xff]
  %v47 = vld [vmem:[%s0 + $0x70] sm:$0xff]
  %v48 = vld [vmem:[%s0 + $0x78] sm:$0xff]
  %v49 = vpack.c.bf16 %v34, %v33
  %v50 = vpack.c.bf16 %v36, %v35
  %v51 = vpack.c.bf16 %v38, %v37
  %v52 = vpack.c.bf16 %v40, %v39
  %v53 = vpack.c.bf16 %v42, %v41
  %v54 = vpack.c.bf16 %v44, %v43
  %v55 = vpack.c.bf16 %v46, %v45
  %v56 = vpack.c.bf16 %v48, %v47
  %v57 = vld [vmem:[%s7] sm:$0xff]
  %v58 = vld [vmem:[%s7 + $0x8] sm:$0xff]
  %v59 = vld [vmem:[%s7 + $0x10] sm:$0xff]
  %v60 = vld [vmem:[%s7 + $0x18] sm:$0xff]
  %v61 = vpack.c.bf16 %v58, %v57
  %v62 = vpack.c.bf16 %v60, %v59
  %v63 = vld [vmem:[%s8] sm:$0x1]
  %v65 = vperm.slane %v63, 0
  %vm67 = vcmask 261120
  %v69 = vsel %vm67, %v49, 0
  %v72 = vsel %vm67, %v50, 0
  %v75 = vsel %vm67, %v51, 0
  %v78 = vsel %vm67, %v52, 0
  %v81 = vsel %vm67, %v53, 0
  %v84 = vsel %vm67, %v54, 0
  %v87 = vsel %vm67, %v55, 0
  %v90 = vsel %vm67, %v56, 0
  %92 = vmatpush.bf16.msra.mxu0 0
  %93 = vmatpush.bf16.msra.mxu0 0
  %94 = vmatpush.bf16.msra.mxu0 0
  %95 = vmatpush.bf16.msra.mxu0 0
  %96 = vmatpush.bf16.msra.mxu0 0
  %97 = vmatpush.bf16.msra.mxu0 0
  %98 = vmatpush.bf16.msra.mxu0 %v62
  %99 = vmatpush.bf16.msra.mxu0 %v61
  %100 = vmatmul.bf16.gmra.mxu0 %v69
  %v101 = vpop.f32.mrf.mxu0
  %v102 = vadd.f32 %v65, %v101
  %v103 = vpop.f32.mrf.mxu0
  %v104 = vadd.f32 %v65, %v103
  %105 = vmatmul.bf16.gmra.mxu0 %v72
  %v106 = vpop.f32.mrf.mxu0
  %v107 = vadd.f32 %v65, %v106
  %v108 = vpop.f32.mrf.mxu0
  %v109 = vadd.f32 %v65, %v108
  %110 = vmatmul.bf16.gmra.mxu0 %v75
  %v111 = vpop.f32.mrf.mxu0
  %v112 = vadd.f32 %v65, %v111
  %v113 = vpop.f32.mrf.mxu0
  %v114 = vadd.f32 %v65, %v113
  %115 = vmatmul.bf16.gmra.mxu0 %v78
  %v116 = vpop.f32.mrf.mxu0
  %v117 = vadd.f32 %v65, %v116
  %v118 = vpop.f32.mrf.mxu0
  %v119 = vadd.f32 %v65, %v118
  %120 = vmatmul.bf16.gmra.mxu0 %v81
  %v121 = vpop.f32.mrf.mxu0
  %v122 = vadd.f32 %v65, %v121
  %v123 = vpop.f32.mrf.mxu0
  %v124 = vadd.f32 %v65, %v123
  %125 = vmatmul.bf16.gmra.mxu0 %v84
  %v126 = vpop.f32.mrf.mxu0
  %v127 = vadd.f32 %v65, %v126
  %v128 = vpop.f32.mrf.mxu0
  %v129 = vadd.f32 %v65, %v128
  %130 = vmatmul.bf16.gmra.mxu0 %v87
  %v131 = vpop.f32.mrf.mxu0
  %v132 = vadd.f32 %v65, %v131
  %v133 = vpop.f32.mrf.mxu0
  %v134 = vadd.f32 %v65, %v133
  %135 = vmatmul.bf16.gmra.mxu0 %v90
  %v136 = vpop.f32.mrf.mxu0
  %v137 = vadd.f32 %v65, %v136
  %v138 = vpop.f32.mrf.mxu0
  %v139 = vadd.f32 %v65, %v138
  %140 = vdwg.mxu0
  %v141 = vsel %vm67, %v33, 0.0
  %142 = vadd.xlane.f32.xlu0 %v141
  %v143 = vpop.xlane.xlu0 %142
  %v144 = vsel %vm67, %v34, 0.0
  %145 = vadd.xlane.f32.xlu0 %v144
  %v146 = vpop.xlane.xlu0 %145
  %v147 = vsel %vm67, %v35, 0.0
  %148 = vadd.xlane.f32.xlu0 %v147
  %v149 = vpop.xlane.xlu0 %148
  %v150 = vsel %vm67, %v36, 0.0
  %151 = vadd.xlane.f32.xlu0 %v150
  %v152 = vpop.xlane.xlu0 %151
  %v153 = vsel %vm67, %v37, 0.0
  %154 = vadd.xlane.f32.xlu0 %v153
  %v155 = vpop.xlane.xlu0 %154
  %v156 = vsel %vm67, %v38, 0.0
  %157 = vadd.xlane.f32.xlu0 %v156
  %v158 = vpop.xlane.xlu0 %157
  %v159 = vsel %vm67, %v39, 0.0
  %160 = vadd.xlane.f32.xlu0 %v159
  %v161 = vpop.xlane.xlu0 %160
  %v162 = vsel %vm67, %v40, 0.0
  %163 = vadd.xlane.f32.xlu0 %v162
  %v164 = vpop.xlane.xlu0 %163
  %v165 = vsel %vm67, %v41, 0.0
  %166 = vadd.xlane.f32.xlu0 %v165
  %v167 = vpop.xlane.xlu0 %166
  %v168 = vsel %vm67, %v42, 0.0
  %169 = vadd.xlane.f32.xlu0 %v168
  %v170 = vpop.xlane.xlu0 %169
  %v171 = vsel %vm67, %v43, 0.0
  %172 = vadd.xlane.f32.xlu0 %v171
  %v173 = vpop.xlane.xlu0 %172
  %v174 = vsel %vm67, %v44, 0.0
  %175 = vadd.xlane.f32.xlu0 %v174
  %v176 = vpop.xlane.xlu0 %175
  %v177 = vsel %vm67, %v45, 0.0
  %178 = vadd.xlane.f32.xlu0 %v177
  %v179 = vpop.xlane.xlu0 %178
  %v180 = vsel %vm67, %v46, 0.0
  %181 = vadd.xlane.f32.xlu0 %v180
  %v182 = vpop.xlane.xlu0 %181
  %v183 = vsel %vm67, %v47, 0.0
  %184 = vadd.xlane.f32.xlu0 %v183
  %v185 = vpop.xlane.xlu0 %184
  %v186 = vsel %vm67, %v48, 0.0
  %187 = vadd.xlane.f32.xlu0 %v186
  %v188 = vpop.xlane.xlu0 %187
  %v189 = vrcp.pop 32.0
  %v190 = vmul.f32 32.0, %v189
  %v191 = vsub.f32 1.0, %v190
  %v192 = vmul.f32 %v189, %v191
  %v193 = vadd.f32 %v189, %v192
  %vm194 = vweird.f32 %v189
  %v195 = vsel %vm194, %v189, %v193
  %v196 = vmul.f32 %v143, %v195
  %v197 = vmul.f32 %v146, %v195
  %v198 = vmul.f32 %v149, %v195
  %v199 = vmul.f32 %v152, %v195
  %v200 = vmul.f32 %v155, %v195
  %v201 = vmul.f32 %v158, %v195
  %v202 = vmul.f32 %v161, %v195
  %v203 = vmul.f32 %v164, %v195
  %v204 = vmul.f32 %v167, %v195
  %v205 = vmul.f32 %v170, %v195
  %v206 = vmul.f32 %v173, %v195
  %v207 = vmul.f32 %v176, %v195
  %v208 = vmul.f32 %v179, %v195
  %v209 = vmul.f32 %v182, %v195
  %v210 = vmul.f32 %v185, %v195
  %v211 = vmul.f32 %v188, %v195
  %v212 = vsub.f32 %v33, %v196
  %v213 = vsub.f32 %v34, %v197
  %v214 = vsub.f32 %v35, %v198
  %v215 = vsub.f32 %v36, %v199
  %v216 = vsub.f32 %v37, %v200
  %v217 = vsub.f32 %v38, %v201
  %v218 = vsub.f32 %v39, %v202
  %v219 = vsub.f32 %v40, %v203
  %v220 = vsub.f32 %v41, %v204
  %v221 = vsub.f32 %v42, %v205
  %v222 = vsub.f32 %v43, %v206
  %v223 = vsub.f32 %v44, %v207
  %v224 = vsub.f32 %v45, %v208
  %v225 = vsub.f32 %v46, %v209
  %v226 = vsub.f32 %v47, %v210
  %v227 = vsub.f32 %v48, %v211
  %v228 = vmul.f32 %v212, %v212
  %v229 = vmul.f32 %v213, %v213
  %v230 = vmul.f32 %v214, %v214
  %v231 = vmul.f32 %v215, %v215
  %v232 = vmul.f32 %v216, %v216
  %v233 = vmul.f32 %v217, %v217
  %v234 = vmul.f32 %v218, %v218
  %v235 = vmul.f32 %v219, %v219
  %v236 = vmul.f32 %v220, %v220
  %v237 = vmul.f32 %v221, %v221
  %v238 = vmul.f32 %v222, %v222
  %v239 = vmul.f32 %v223, %v223
  %v240 = vmul.f32 %v224, %v224
  %v241 = vmul.f32 %v225, %v225
  %v242 = vmul.f32 %v226, %v226
  %v243 = vmul.f32 %v227, %v227
  %v244 = vsel %vm67, %v228, 0.0
  %245 = vadd.xlane.f32.xlu0 %v244
  %v246 = vpop.xlane.xlu0 %245
  %v247 = vsel %vm67, %v229, 0.0
  %248 = vadd.xlane.f32.xlu0 %v247
  %v249 = vpop.xlane.xlu0 %248
  %v250 = vsel %vm67, %v230, 0.0
  %251 = vadd.xlane.f32.xlu0 %v250
  %v252 = vpop.xlane.xlu0 %251
  %v253 = vsel %vm67, %v231, 0.0
  %254 = vadd.xlane.f32.xlu0 %v253
  %v255 = vpop.xlane.xlu0 %254
  %v256 = vsel %vm67, %v232, 0.0
  %257 = vadd.xlane.f32.xlu0 %v256
  %v258 = vpop.xlane.xlu0 %257
  %v259 = vsel %vm67, %v233, 0.0
  %260 = vadd.xlane.f32.xlu0 %v259
  %v261 = vpop.xlane.xlu0 %260
  %v262 = vsel %vm67, %v234, 0.0
  %263 = vadd.xlane.f32.xlu0 %v262
  %v264 = vpop.xlane.xlu0 %263
  %v265 = vsel %vm67, %v235, 0.0
  %266 = vadd.xlane.f32.xlu0 %v265
  %v267 = vpop.xlane.xlu0 %266
  %v268 = vsel %vm67, %v236, 0.0
  %269 = vadd.xlane.f32.xlu0 %v268
  %v270 = vpop.xlane.xlu0 %269
  %v271 = vsel %vm67, %v237, 0.0
  %272 = vadd.xlane.f32.xlu0 %v271
  %v273 = vpop.xlane.xlu0 %272
  %v274 = vsel %vm67, %v238, 0.0
  %275 = vadd.xlane.f32.xlu0 %v274
  %v276 = vpop.xlane.xlu0 %275
  %v277 = vsel %vm67, %v239, 0.0
  %278 = vadd.xlane.f32.xlu0 %v277
  %v279 = vpop.xlane.xlu0 %278
  %v280 = vsel %vm67, %v240, 0.0
  %281 = vadd.xlane.f32.xlu0 %v280
  %v282 = vpop.xlane.xlu0 %281
  %v283 = vsel %vm67, %v241, 0.0
  %284 = vadd.xlane.f32.xlu0 %v283
  %v285 = vpop.xlane.xlu0 %284
  %v286 = vsel %vm67, %v242, 0.0
  %287 = vadd.xlane.f32.xlu0 %v286
  %v288 = vpop.xlane.xlu0 %287
  %v289 = vsel %vm67, %v243, 0.0
  %290 = vadd.xlane.f32.xlu0 %v289
  %v291 = vpop.xlane.xlu0 %290
  %v292 = vmul.f32 %v246, %v195
  %v293 = vmul.f32 %v249, %v195
  %v294 = vmul.f32 %v252, %v195
  %v295 = vmul.f32 %v255, %v195
  %v296 = vmul.f32 %v258, %v195
  %v297 = vmul.f32 %v261, %v195
  %v298 = vmul.f32 %v264, %v195
  %v299 = vmul.f32 %v267, %v195
  %v300 = vmul.f32 %v270, %v195
  %v301 = vmul.f32 %v273, %v195
  %v302 = vmul.f32 %v276, %v195
  %v303 = vmul.f32 %v279, %v195
  %v304 = vmul.f32 %v282, %v195
  %v305 = vmul.f32 %v285, %v195
  %v306 = vmul.f32 %v288, %v195
  %v307 = vmul.f32 %v291, %v195
  %v308 = vadd.f32 %v292, 1e-05
  %v309 = vadd.f32 %v293, 1e-05
  %v310 = vadd.f32 %v294, 1e-05
  %v311 = vadd.f32 %v295, 1e-05
  %v312 = vadd.f32 %v296, 1e-05
  %v313 = vadd.f32 %v297, 1e-05
  %v314 = vadd.f32 %v298, 1e-05
  %v315 = vadd.f32 %v299, 1e-05
  %v316 = vadd.f32 %v300, 1e-05
  %v317 = vadd.f32 %v301, 1e-05
  %v318 = vadd.f32 %v302, 1e-05
  %v319 = vadd.f32 %v303, 1e-05
  %v320 = vadd.f32 %v304, 1e-05
  %v321 = vadd.f32 %v305, 1e-05
  %v322 = vadd.f32 %v306, 1e-05
  %v323 = vadd.f32 %v307, 1e-05
  %v324 = vrsqrt.pop %v308
  %v325 = vmul.f32 %v324, %v308
  %v326 = vmul.f32 %v325, %v324
  %v327 = vmul.f32 0.5, %v326
  %v328 = vsub.f32 1.5, %v327
  %v329 = vmul.f32 %v324, %v328
  %vm330 = vweird.f32 %v308
  %vm331 = vweird.f32 %v324
  %vm332 = vmor %vm330, %vm331
  %v333 = vsel %vm332, %v324, %v329
  %v334 = vrsqrt.pop %v309
  %v335 = vmul.f32 %v334, %v309
  %v336 = vmul.f32 %v335, %v334
  %v337 = vmul.f32 0.5, %v336
  %v338 = vsub.f32 1.5, %v337
  %v339 = vmul.f32 %v334, %v338
  %vm340 = vweird.f32 %v309
  %vm341 = vweird.f32 %v334
  %vm342 = vmor %vm340, %vm341
  %v343 = vsel %vm342, %v334, %v339
  %v344 = vrsqrt.pop %v310
  %v345 = vmul.f32 %v344, %v310
  %v346 = vmul.f32 %v345, %v344
  %v347 = vmul.f32 0.5, %v346
  %v348 = vsub.f32 1.5, %v347
  %v349 = vmul.f32 %v344, %v348
  %vm350 = vweird.f32 %v310
  %vm351 = vweird.f32 %v344
  %vm352 = vmor %vm350, %vm351
  %v353 = vsel %vm352, %v344, %v349
  %v354 = vrsqrt.pop %v311
  %v355 = vmul.f32 %v354, %v311
  %v356 = vmul.f32 %v355, %v354
  %v357 = vmul.f32 0.5, %v356
  %v358 = vsub.f32 1.5, %v357
  %v359 = vmul.f32 %v354, %v358
  %vm360 = vweird.f32 %v311
  %vm361 = vweird.f32 %v354
  %vm362 = vmor %vm360, %vm361
  %v363 = vsel %vm362, %v354, %v359
  %v364 = vrsqrt.pop %v312
  %v365 = vmul.f32 %v364, %v312
  %v366 = vmul.f32 %v365, %v364
  %v367 = vmul.f32 0.5, %v366
  %v368 = vsub.f32 1.5, %v367
  %v369 = vmul.f32 %v364, %v368
  %vm370 = vweird.f32 %v312
  %vm371 = vweird.f32 %v364
  %vm372 = vmor %vm370, %vm371
  %v373 = vsel %vm372, %v364, %v369
  %v374 = vrsqrt.pop %v313
  %v375 = vmul.f32 %v374, %v313
  %v376 = vmul.f32 %v375, %v374
  %v377 = vmul.f32 0.5, %v376
  %v378 = vsub.f32 1.5, %v377
  %v379 = vmul.f32 %v374, %v378
  %vm380 = vweird.f32 %v313
  %vm381 = vweird.f32 %v374
  %vm382 = vmor %vm380, %vm381
  %v383 = vsel %vm382, %v374, %v379
  %v384 = vrsqrt.pop %v314
  %v385 = vmul.f32 %v384, %v314
  %v386 = vmul.f32 %v385, %v384
  %v387 = vmul.f32 0.5, %v386
  %v388 = vsub.f32 1.5, %v387
  %v389 = vmul.f32 %v384, %v388
  %vm390 = vweird.f32 %v314
  %vm391 = vweird.f32 %v384
  %vm392 = vmor %vm390, %vm391
  %v393 = vsel %vm392, %v384, %v389
  %v394 = vrsqrt.pop %v315
  %v395 = vmul.f32 %v394, %v315
  %v396 = vmul.f32 %v395, %v394
  %v397 = vmul.f32 0.5, %v396
  %v398 = vsub.f32 1.5, %v397
  %v399 = vmul.f32 %v394, %v398
  %vm400 = vweird.f32 %v315
  %vm401 = vweird.f32 %v394
  %vm402 = vmor %vm400, %vm401
  %v403 = vsel %vm402, %v394, %v399
  %v404 = vrsqrt.pop %v316
  %v405 = vmul.f32 %v404, %v316
  %v406 = vmul.f32 %v405, %v404
  %v407 = vmul.f32 0.5, %v406
  %v408 = vsub.f32 1.5, %v407
  %v409 = vmul.f32 %v404, %v408
  %vm410 = vweird.f32 %v316
  %vm411 = vweird.f32 %v404
  %vm412 = vmor %vm410, %vm411
  %v413 = vsel %vm412, %v404, %v409
  %v414 = vrsqrt.pop %v317
  %v415 = vmul.f32 %v414, %v317
  %v416 = vmul.f32 %v415, %v414
  %v417 = vmul.f32 0.5, %v416
  %v418 = vsub.f32 1.5, %v417
  %v419 = vmul.f32 %v414, %v418
  %vm420 = vweird.f32 %v317
  %vm421 = vweird.f32 %v414
  %vm422 = vmor %vm420, %vm421
  %v423 = vsel %vm422, %v414, %v419
  %v424 = vrsqrt.pop %v318
  %v425 = vmul.f32 %v424, %v318
  %v426 = vmul.f32 %v425, %v424
  %v427 = vmul.f32 0.5, %v426
  %v428 = vsub.f32 1.5, %v427
  %v429 = vmul.f32 %v424, %v428
  %vm430 = vweird.f32 %v318
  %vm431 = vweird.f32 %v424
  %vm432 = vmor %vm430, %vm431
  %v433 = vsel %vm432, %v424, %v429
  %v434 = vrsqrt.pop %v319
  %v435 = vmul.f32 %v434, %v319
  %v436 = vmul.f32 %v435, %v434
  %v437 = vmul.f32 0.5, %v436
  %v438 = vsub.f32 1.5, %v437
  %v439 = vmul.f32 %v434, %v438
  %vm440 = vweird.f32 %v319
  %vm441 = vweird.f32 %v434
  %vm442 = vmor %vm440, %vm441
  %v443 = vsel %vm442, %v434, %v439
  %v444 = vrsqrt.pop %v320
  %v445 = vmul.f32 %v444, %v320
  %v446 = vmul.f32 %v445, %v444
  %v447 = vmul.f32 0.5, %v446
  %v448 = vsub.f32 1.5, %v447
  %v449 = vmul.f32 %v444, %v448
  %vm450 = vweird.f32 %v320
  %vm451 = vweird.f32 %v444
  %vm452 = vmor %vm450, %vm451
  %v453 = vsel %vm452, %v444, %v449
  %v454 = vrsqrt.pop %v321
  %v455 = vmul.f32 %v454, %v321
  %v456 = vmul.f32 %v455, %v454
  %v457 = vmul.f32 0.5, %v456
  %v458 = vsub.f32 1.5, %v457
  %v459 = vmul.f32 %v454, %v458
  %vm460 = vweird.f32 %v321
  %vm461 = vweird.f32 %v454
  %vm462 = vmor %vm460, %vm461
  %v463 = vsel %vm462, %v454, %v459
  %v464 = vrsqrt.pop %v322
  %v465 = vmul.f32 %v464, %v322
  %v466 = vmul.f32 %v465, %v464
  %v467 = vmul.f32 0.5, %v466
  %v468 = vsub.f32 1.5, %v467
  %v469 = vmul.f32 %v464, %v468
  %vm470 = vweird.f32 %v322
  %vm471 = vweird.f32 %v464
  %vm472 = vmor %vm470, %vm471
  %v473 = vsel %vm472, %v464, %v469
  %v474 = vrsqrt.pop %v323
  %v475 = vmul.f32 %v474, %v323
  %v476 = vmul.f32 %v475, %v474
  %v477 = vmul.f32 0.5, %v476
  %v478 = vsub.f32 1.5, %v477
  %v479 = vmul.f32 %v474, %v478
  %vm480 = vweird.f32 %v323
  %vm481 = vweird.f32 %v474
  %vm482 = vmor %vm480, %vm481
  %v483 = vsel %vm482, %v474, %v479
  %v484 = vmul.f32 %v212, %v333
  %v485 = vmul.f32 %v213, %v343
  %v486 = vmul.f32 %v214, %v353
  %v487 = vmul.f32 %v215, %v363
  %v488 = vmul.f32 %v216, %v373
  %v489 = vmul.f32 %v217, %v383
  %v490 = vmul.f32 %v218, %v393
  %v491 = vmul.f32 %v219, %v403
  %v492 = vmul.f32 %v220, %v413
  %v493 = vmul.f32 %v221, %v423
  %v494 = vmul.f32 %v222, %v433
  %v495 = vmul.f32 %v223, %v443
  %v496 = vmul.f32 %v224, %v453
  %v497 = vmul.f32 %v225, %v463
  %v498 = vmul.f32 %v226, %v473
  %v499 = vmul.f32 %v227, %v483
  %v500 = vld [vmem:[%s1] sm:$0x1]
  %v502 = vperm.slane %v500, 0
  %v504 = vmul.f32 %v484, %v502
  %v505 = vmul.f32 %v485, %v502
  %v506 = vmul.f32 %v486, %v502
  %v507 = vmul.f32 %v487, %v502
  %v508 = vmul.f32 %v488, %v502
  %v509 = vmul.f32 %v489, %v502
  %v510 = vmul.f32 %v490, %v502
  %v511 = vmul.f32 %v491, %v502
  %v512 = vmul.f32 %v492, %v502
  %v513 = vmul.f32 %v493, %v502
  %v514 = vmul.f32 %v494, %v502
  %v515 = vmul.f32 %v495, %v502
  %v516 = vmul.f32 %v496, %v502
  %v517 = vmul.f32 %v497, %v502
  %v518 = vmul.f32 %v498, %v502
  %v519 = vmul.f32 %v499, %v502
  %v520 = vld [vmem:[%s2] sm:$0x1]
  %v522 = vperm.slane %v520, 0
  %v524 = vadd.f32 %v504, %v522
  %v525 = vadd.f32 %v505, %v522
  %v526 = vadd.f32 %v506, %v522
  %v527 = vadd.f32 %v507, %v522
  %v528 = vadd.f32 %v508, %v522
  %v529 = vadd.f32 %v509, %v522
  %v530 = vadd.f32 %v510, %v522
  %v531 = vadd.f32 %v511, %v522
  %v532 = vadd.f32 %v512, %v522
  %v533 = vadd.f32 %v513, %v522
  %v534 = vadd.f32 %v514, %v522
  %v535 = vadd.f32 %v515, %v522
  %v536 = vadd.f32 %v516, %v522
  %v537 = vadd.f32 %v517, %v522
  %v538 = vadd.f32 %v518, %v522
  %v539 = vadd.f32 %v519, %v522
  %v540 = vpack.c.bf16 %v525, %v524
  %v541 = vpack.c.bf16 %v527, %v526
  %v542 = vpack.c.bf16 %v529, %v528
  %v543 = vpack.c.bf16 %v531, %v530
  %v544 = vpack.c.bf16 %v533, %v532
  %v545 = vpack.c.bf16 %v535, %v534
  %v546 = vpack.c.bf16 %v537, %v536
  %v547 = vpack.c.bf16 %v539, %v538
  %v548 = vld [vmem:[%s3] sm:$0xff]
  %v549 = vld [vmem:[%s3 + $0x8] sm:$0xff]
  %v550 = vld [vmem:[%s3 + $0x10] sm:$0xff]
  %v551 = vld [vmem:[%s3 + $0x18] sm:$0xff]
  %v552 = vpack.c.bf16 %v549, %v548
  %v553 = vpack.c.bf16 %v551, %v550
  %v554 = vld [vmem:[%s4] sm:$0x1]
  %v556 = vperm.slane %v554, 0
  %v559 = vsel %vm67, %v540, 0
  %v562 = vsel %vm67, %v541, 0
  %v565 = vsel %vm67, %v542, 0
  %v568 = vsel %vm67, %v543, 0
  %v571 = vsel %vm67, %v544, 0
  %v574 = vsel %vm67, %v545, 0
  %v577 = vsel %vm67, %v546, 0
  %v580 = vsel %vm67, %v547, 0
  %582 = vmatpush.bf16.msra.mxu0 0
  %583 = vmatpush.bf16.msra.mxu0 0
  %584 = vmatpush.bf16.msra.mxu0 0
  %585 = vmatpush.bf16.msra.mxu0 0
  %586 = vmatpush.bf16.msra.mxu0 0
  %587 = vmatpush.bf16.msra.mxu0 0
  %588 = vmatpush.bf16.msra.mxu0 %v553
  %589 = vmatpush.bf16.msra.mxu0 %v552
  %590 = vmatmul.bf16.gmra.mxu0 %v559
  %v591 = vpop.f32.mrf.mxu0
  %v592 = vadd.f32 %v556, %v591
  %v593 = vpop.f32.mrf.mxu0
  %v594 = vadd.f32 %v556, %v593
  %595 = vmatmul.bf16.gmra.mxu0 %v562
  %v596 = vpop.f32.mrf.mxu0
  %v597 = vadd.f32 %v556, %v596
  %v598 = vpop.f32.mrf.mxu0
  %v599 = vadd.f32 %v556, %v598
  %600 = vmatmul.bf16.gmra.mxu0 %v565
  %v601 = vpop.f32.mrf.mxu0
  %v602 = vadd.f32 %v556, %v601
  %v603 = vpop.f32.mrf.mxu0
  %v604 = vadd.f32 %v556, %v603
  %605 = vmatmul.bf16.gmra.mxu0 %v568
  %v606 = vpop.f32.mrf.mxu0
  %v607 = vadd.f32 %v556, %v606
  %v608 = vpop.f32.mrf.mxu0
  %v609 = vadd.f32 %v556, %v608
  %610 = vmatmul.bf16.gmra.mxu0 %v571
  %v611 = vpop.f32.mrf.mxu0
  %v612 = vadd.f32 %v556, %v611
  %v613 = vpop.f32.mrf.mxu0
  %v614 = vadd.f32 %v556, %v613
  %615 = vmatmul.bf16.gmra.mxu0 %v574
  %v616 = vpop.f32.mrf.mxu0
  %v617 = vadd.f32 %v556, %v616
  %v618 = vpop.f32.mrf.mxu0
  %v619 = vadd.f32 %v556, %v618
  %620 = vmatmul.bf16.gmra.mxu0 %v577
  %v621 = vpop.f32.mrf.mxu0
  %v622 = vadd.f32 %v556, %v621
  %v623 = vpop.f32.mrf.mxu0
  %v624 = vadd.f32 %v556, %v623
  %625 = vmatmul.bf16.gmra.mxu0 %v580
  %v626 = vpop.f32.mrf.mxu0
  %v627 = vadd.f32 %v556, %v626
  %v628 = vpop.f32.mrf.mxu0
  %v629 = vadd.f32 %v556, %v628
  %630 = vdwg.mxu0
  %v631 = vmul.f32 %v592, 0.5
  %v632 = vmul.f32 %v594, 0.5
  %v633 = vmul.f32 %v597, 0.5
  %v634 = vmul.f32 %v599, 0.5
  %v635 = vmul.f32 %v602, 0.5
  %v636 = vmul.f32 %v604, 0.5
  %v637 = vmul.f32 %v607, 0.5
  %v638 = vmul.f32 %v609, 0.5
  %v639 = vmul.f32 %v612, 0.5
  %v640 = vmul.f32 %v614, 0.5
  %v641 = vmul.f32 %v617, 0.5
  %v642 = vmul.f32 %v619, 0.5
  %v643 = vmul.f32 %v622, 0.5
  %v644 = vmul.f32 %v624, 0.5
  %v645 = vmul.f32 %v627, 0.5
  %v646 = vmul.f32 %v629, 0.5
  %v647 = vmul.f32 %v592, 0.70710677
  %v648 = vmul.f32 %v594, 0.70710677
  %v649 = vmul.f32 %v597, 0.70710677
  %v650 = vmul.f32 %v599, 0.70710677
  %v651 = vmul.f32 %v602, 0.70710677
  %v652 = vmul.f32 %v604, 0.70710677
  %v653 = vmul.f32 %v607, 0.70710677
  %v654 = vmul.f32 %v609, 0.70710677
  %v655 = vmul.f32 %v612, 0.70710677
  %v656 = vmul.f32 %v614, 0.70710677
  %v657 = vmul.f32 %v617, 0.70710677
  %v658 = vmul.f32 %v619, 0.70710677
  %v659 = vmul.f32 %v622, 0.70710677
  %v660 = vmul.f32 %v624, 0.70710677
  %v661 = vmul.f32 %v627, 0.70710677
  %v662 = vmul.f32 %v629, 0.70710677
  %v663 = vmul.f32 %v647, %v647
  %v664 = vmin.f32 16.0, %v663
  %v665 = vmul.f32 %v664, 2.1237322e-06
  %v666 = vadd.f32 %v665, 0.00028619796
  %v667 = vmul.f32 %v664, %v666
  %v668 = vadd.f32 %v667, 0.0036580483
  %v669 = vmul.f32 %v664, %v668
  %v670 = vadd.f32 %v669, 0.05243302
  %v671 = vmul.f32 %v664, %v670
  %v672 = vadd.f32 %v671, 0.18741608
  %v673 = vmul.f32 %v664, %v672
  %v674 = vadd.f32 %v673, 1.1283791
  %v675 = vmul.f32 %v647, %v674
  %v676 = vmul.f32 %v664, 3.8918573e-05
  %v677 = vadd.f32 %v676, 0.001143296
  %v678 = vmul.f32 %v664, %v677
  %v679 = vadd.f32 %v678, 0.014752088
  %v680 = vmul.f32 %v664, %v679
  %v681 = vadd.f32 %v680, 0.112945676
  %v682 = vmul.f32 %v664, %v681
  %v683 = vadd.f32 %v682, 0.4994258
  %v684 = vmul.f32 %v664, %v683
  %v685 = vadd.f32 %v684, 1.0
  %v686 = vrcp.pop %v685
  %v687 = vmul.f32 %v685, %v686
  %v688 = vsub.f32 1.0, %v687
  %v689 = vmul.f32 %v686, %v688
  %v690 = vadd.f32 %v686, %v689
  %vm691 = vweird.f32 %v685
  %vm692 = vweird.f32 %v686
  %vm693 = vmor %vm691, %vm692
  %v694 = vsel %vm693, %v686, %v690
  %v695 = vand.u32 2147483647, %v685
  %vm696 = vcmp.eq.f32.partialorder %v695, 8.507059e+37
  %v697 = vand.u32 %v685, 2147483648
  %v698 = vor.u32 1.1754944e-38, %v697
  %v699 = vsel %vm696, %v698, %v694
  %v700 = vmul.f32 %v675, %v699
  %v701 = vmin.f32 %v700, 1.0
  %v702 = vmax.f32 %v701, -1.0
  %v703 = vmul.f32 %v648, %v648
  %v704 = vmin.f32 16.0, %v703
  %v705 = vmul.f32 %v704, 2.1237322e-06
  %v706 = vadd.f32 %v705, 0.00028619796
  %v707 = vmul.f32 %v704, %v706
  %v708 = vadd.f32 %v707, 0.0036580483
  %v709 = vmul.f32 %v704, %v708
  %v710 = vadd.f32 %v709, 0.05243302
  %v711 = vmul.f32 %v704, %v710
  %v712 = vadd.f32 %v711, 0.18741608
  %v713 = vmul.f32 %v704, %v712
  %v714 = vadd.f32 %v713, 1.1283791
  %v715 = vmul.f32 %v648, %v714
  %v716 = vmul.f32 %v704, 3.8918573e-05
  %v717 = vadd.f32 %v716, 0.001143296
  %v718 = vmul.f32 %v704, %v717
  %v719 = vadd.f32 %v718, 0.014752088
  %v720 = vmul.f32 %v704, %v719
  %v721 = vadd.f32 %v720, 0.112945676
  %v722 = vmul.f32 %v704, %v721
  %v723 = vadd.f32 %v722, 0.4994258
  %v724 = vmul.f32 %v704, %v723
  %v725 = vadd.f32 %v724, 1.0
  %v726 = vrcp.pop %v725
  %v727 = vmul.f32 %v725, %v726
  %v728 = vsub.f32 1.0, %v727
  %v729 = vmul.f32 %v726, %v728
  %v730 = vadd.f32 %v726, %v729
  %vm731 = vweird.f32 %v725
  %vm732 = vweird.f32 %v726
  %vm733 = vmor %vm731, %vm732
  %v734 = vsel %vm733, %v726, %v730
  %v735 = vand.u32 2147483647, %v725
  %vm736 = vcmp.eq.f32.partialorder %v735, 8.507059e+37
  %v737 = vand.u32 %v725, 2147483648
  %v738 = vor.u32 1.1754944e-38, %v737
  %v739 = vsel %vm736, %v738, %v734
  %v740 = vmul.f32 %v715, %v739
  %v741 = vmin.f32 %v740, 1.0
  %v742 = vmax.f32 %v741, -1.0
  %v743 = vmul.f32 %v649, %v649
  %v744 = vmin.f32 16.0, %v743
  %v745 = vmul.f32 %v744, 2.1237322e-06
  %v746 = vadd.f32 %v745, 0.00028619796
  %v747 = vmul.f32 %v744, %v746
  %v748 = vadd.f32 %v747, 0.0036580483
  %v749 = vmul.f32 %v744, %v748
  %v750 = vadd.f32 %v749, 0.05243302
  %v751 = vmul.f32 %v744, %v750
  %v752 = vadd.f32 %v751, 0.18741608
  %v753 = vmul.f32 %v744, %v752
  %v754 = vadd.f32 %v753, 1.1283791
  %v755 = vmul.f32 %v649, %v754
  %v756 = vmul.f32 %v744, 3.8918573e-05
  %v757 = vadd.f32 %v756, 0.001143296
  %v758 = vmul.f32 %v744, %v757
  %v759 = vadd.f32 %v758, 0.014752088
  %v760 = vmul.f32 %v744, %v759
  %v761 = vadd.f32 %v760, 0.112945676
  %v762 = vmul.f32 %v744, %v761
  %v763 = vadd.f32 %v762, 0.4994258
  %v764 = vmul.f32 %v744, %v763
  %v765 = vadd.f32 %v764, 1.0
  %v766 = vrcp.pop %v765
  %v767 = vmul.f32 %v765, %v766
  %v768 = vsub.f32 1.0, %v767
  %v769 = vmul.f32 %v766, %v768
  %v770 = vadd.f32 %v766, %v769
  %vm771 = vweird.f32 %v765
  %vm772 = vweird.f32 %v766
  %vm773 = vmor %vm771, %vm772
  %v774 = vsel %vm773, %v766, %v770
  %v775 = vand.u32 2147483647, %v765
  %vm776 = vcmp.eq.f32.partialorder %v775, 8.507059e+37
  %v777 = vand.u32 %v765, 2147483648
  %v778 = vor.u32 1.1754944e-38, %v777
  %v779 = vsel %vm776, %v778, %v774
  %v780 = vmul.f32 %v755, %v779
  %v781 = vmin.f32 %v780, 1.0
  %v782 = vmax.f32 %v781, -1.0
  %v783 = vmul.f32 %v650, %v650
  %v784 = vmin.f32 16.0, %v783
  %v785 = vmul.f32 %v784, 2.1237322e-06
  %v786 = vadd.f32 %v785, 0.00028619796
  %v787 = vmul.f32 %v784, %v786
  %v788 = vadd.f32 %v787, 0.0036580483
  %v789 = vmul.f32 %v784, %v788
  %v790 = vadd.f32 %v789, 0.05243302
  %v791 = vmul.f32 %v784, %v790
  %v792 = vadd.f32 %v791, 0.18741608
  %v793 = vmul.f32 %v784, %v792
  %v794 = vadd.f32 %v793, 1.1283791
  %v795 = vmul.f32 %v650, %v794
  %v796 = vmul.f32 %v784, 3.8918573e-05
  %v797 = vadd.f32 %v796, 0.001143296
  %v798 = vmul.f32 %v784, %v797
  %v799 = vadd.f32 %v798, 0.014752088
  %v800 = vmul.f32 %v784, %v799
  %v801 = vadd.f32 %v800, 0.112945676
  %v802 = vmul.f32 %v784, %v801
  %v803 = vadd.f32 %v802, 0.4994258
  %v804 = vmul.f32 %v784, %v803
  %v805 = vadd.f32 %v804, 1.0
  %v806 = vrcp.pop %v805
  %v807 = vmul.f32 %v805, %v806
  %v808 = vsub.f32 1.0, %v807
  %v809 = vmul.f32 %v806, %v808
  %v810 = vadd.f32 %v806, %v809
  %vm811 = vweird.f32 %v805
  %vm812 = vweird.f32 %v806
  %vm813 = vmor %vm811, %vm812
  %v814 = vsel %vm813, %v806, %v810
  %v815 = vand.u32 2147483647, %v805
  %vm816 = vcmp.eq.f32.partialorder %v815, 8.507059e+37
  %v817 = vand.u32 %v805, 2147483648
  %v818 = vor.u32 1.1754944e-38, %v817
  %v819 = vsel %vm816, %v818, %v814
  %v820 = vmul.f32 %v795, %v819
  %v821 = vmin.f32 %v820, 1.0
  %v822 = vmax.f32 %v821, -1.0
  %v823 = vmul.f32 %v651, %v651
  %v824 = vmin.f32 16.0, %v823
  %v825 = vmul.f32 %v824, 2.1237322e-06
  %v826 = vadd.f32 %v825, 0.00028619796
  %v827 = vmul.f32 %v824, %v826
  %v828 = vadd.f32 %v827, 0.0036580483
  %v829 = vmul.f32 %v824, %v828
  %v830 = vadd.f32 %v829, 0.05243302
  %v831 = vmul.f32 %v824, %v830
  %v832 = vadd.f32 %v831, 0.18741608
  %v833 = vmul.f32 %v824, %v832
  %v834 = vadd.f32 %v833, 1.1283791
  %v835 = vmul.f32 %v651, %v834
  %v836 = vmul.f32 %v824, 3.8918573e-05
  %v837 = vadd.f32 %v836, 0.001143296
  %v838 = vmul.f32 %v824, %v837
  %v839 = vadd.f32 %v838, 0.014752088
  %v840 = vmul.f32 %v824, %v839
  %v841 = vadd.f32 %v840, 0.112945676
  %v842 = vmul.f32 %v824, %v841
  %v843 = vadd.f32 %v842, 0.4994258
  %v844 = vmul.f32 %v824, %v843
  %v845 = vadd.f32 %v844, 1.0
  %v846 = vrcp.pop %v845
  %v847 = vmul.f32 %v845, %v846
  %v848 = vsub.f32 1.0, %v847
  %v849 = vmul.f32 %v846, %v848
  %v850 = vadd.f32 %v846, %v849
  %vm851 = vweird.f32 %v845
  %vm852 = vweird.f32 %v846
  %vm853 = vmor %vm851, %vm852
  %v854 = vsel %vm853, %v846, %v850
  %v855 = vand.u32 2147483647, %v845
  %vm856 = vcmp.eq.f32.partialorder %v855, 8.507059e+37
  %v857 = vand.u32 %v845, 2147483648
  %v858 = vor.u32 1.1754944e-38, %v857
  %v859 = vsel %vm856, %v858, %v854
  %v860 = vmul.f32 %v835, %v859
  %v861 = vmin.f32 %v860, 1.0
  %v862 = vmax.f32 %v861, -1.0
  %v863 = vmul.f32 %v652, %v652
  %v864 = vmin.f32 16.0, %v863
  %v865 = vmul.f32 %v864, 2.1237322e-06
  %v866 = vadd.f32 %v865, 0.00028619796
  %v867 = vmul.f32 %v864, %v866
  %v868 = vadd.f32 %v867, 0.0036580483
  %v869 = vmul.f32 %v864, %v868
  %v870 = vadd.f32 %v869, 0.05243302
  %v871 = vmul.f32 %v864, %v870
  %v872 = vadd.f32 %v871, 0.18741608
  %v873 = vmul.f32 %v864, %v872
  %v874 = vadd.f32 %v873, 1.1283791
  %v875 = vmul.f32 %v652, %v874
  %v876 = vmul.f32 %v864, 3.8918573e-05
  %v877 = vadd.f32 %v876, 0.001143296
  %v878 = vmul.f32 %v864, %v877
  %v879 = vadd.f32 %v878, 0.014752088
  %v880 = vmul.f32 %v864, %v879
  %v881 = vadd.f32 %v880, 0.112945676
  %v882 = vmul.f32 %v864, %v881
  %v883 = vadd.f32 %v882, 0.4994258
  %v884 = vmul.f32 %v864, %v883
  %v885 = vadd.f32 %v884, 1.0
  %v886 = vrcp.pop %v885
  %v887 = vmul.f32 %v885, %v886
  %v888 = vsub.f32 1.0, %v887
  %v889 = vmul.f32 %v886, %v888
  %v890 = vadd.f32 %v886, %v889
  %vm891 = vweird.f32 %v885
  %vm892 = vweird.f32 %v886
  %vm893 = vmor %vm891, %vm892
  %v894 = vsel %vm893, %v886, %v890
  %v895 = vand.u32 2147483647, %v885
  %vm896 = vcmp.eq.f32.partialorder %v895, 8.507059e+37
  %v897 = vand.u32 %v885, 2147483648
  %v898 = vor.u32 1.1754944e-38, %v897
  %v899 = vsel %vm896, %v898, %v894
  %v900 = vmul.f32 %v875, %v899
  %v901 = vmin.f32 %v900, 1.0
  %v902 = vmax.f32 %v901, -1.0
  %v903 = vmul.f32 %v653, %v653
  %v904 = vmin.f32 16.0, %v903
  %v905 = vmul.f32 %v904, 2.1237322e-06
  %v906 = vadd.f32 %v905, 0.00028619796
  %v907 = vmul.f32 %v904, %v906
  %v908 = vadd.f32 %v907, 0.0036580483
  %v909 = vmul.f32 %v904, %v908
  %v910 = vadd.f32 %v909, 0.05243302
  %v911 = vmul.f32 %v904, %v910
  %v912 = vadd.f32 %v911, 0.18741608
  %v913 = vmul.f32 %v904, %v912
  %v914 = vadd.f32 %v913, 1.1283791
  %v915 = vmul.f32 %v653, %v914
  %v916 = vmul.f32 %v904, 3.8918573e-05
  %v917 = vadd.f32 %v916, 0.001143296
  %v918 = vmul.f32 %v904, %v917
  %v919 = vadd.f32 %v918, 0.014752088
  %v920 = vmul.f32 %v904, %v919
  %v921 = vadd.f32 %v920, 0.112945676
  %v922 = vmul.f32 %v904, %v921
  %v923 = vadd.f32 %v922, 0.4994258
  %v924 = vmul.f32 %v904, %v923
  %v925 = vadd.f32 %v924, 1.0
  %v926 = vrcp.pop %v925
  %v927 = vmul.f32 %v925, %v926
  %v928 = vsub.f32 1.0, %v927
  %v929 = vmul.f32 %v926, %v928
  %v930 = vadd.f32 %v926, %v929
  %vm931 = vweird.f32 %v925
  %vm932 = vweird.f32 %v926
  %vm933 = vmor %vm931, %vm932
  %v934 = vsel %vm933, %v926, %v930
  %v935 = vand.u32 2147483647, %v925
  %vm936 = vcmp.eq.f32.partialorder %v935, 8.507059e+37
  %v937 = vand.u32 %v925, 2147483648
  %v938 = vor.u32 1.1754944e-38, %v937
  %v939 = vsel %vm936, %v938, %v934
  %v940 = vmul.f32 %v915, %v939
  %v941 = vmin.f32 %v940, 1.0
  %v942 = vmax.f32 %v941, -1.0
  %v943 = vmul.f32 %v654, %v654
  %v944 = vmin.f32 16.0, %v943
  %v945 = vmul.f32 %v944, 2.1237322e-06
  %v946 = vadd.f32 %v945, 0.00028619796
  %v947 = vmul.f32 %v944, %v946
  %v948 = vadd.f32 %v947, 0.0036580483
  %v949 = vmul.f32 %v944, %v948
  %v950 = vadd.f32 %v949, 0.05243302
  %v951 = vmul.f32 %v944, %v950
  %v952 = vadd.f32 %v951, 0.18741608
  %v953 = vmul.f32 %v944, %v952
  %v954 = vadd.f32 %v953, 1.1283791
  %v955 = vmul.f32 %v654, %v954
  %v956 = vmul.f32 %v944, 3.8918573e-05
  %v957 = vadd.f32 %v956, 0.001143296
  %v958 = vmul.f32 %v944, %v957
  %v959 = vadd.f32 %v958, 0.014752088
  %v960 = vmul.f32 %v944, %v959
  %v961 = vadd.f32 %v960, 0.112945676
  %v962 = vmul.f32 %v944, %v961
  %v963 = vadd.f32 %v962, 0.4994258
  %v964 = vmul.f32 %v944, %v963
  %v965 = vadd.f32 %v964, 1.0
  %v966 = vrcp.pop %v965
  %v967 = vmul.f32 %v965, %v966
  %v968 = vsub.f32 1.0, %v967
  %v969 = vmul.f32 %v966, %v968
  %v970 = vadd.f32 %v966, %v969
  %vm971 = vweird.f32 %v965
  %vm972 = vweird.f32 %v966
  %vm973 = vmor %vm971, %vm972
  %v974 = vsel %vm973, %v966, %v970
  %v975 = vand.u32 2147483647, %v965
  %vm976 = vcmp.eq.f32.partialorder %v975, 8.507059e+37
  %v977 = vand.u32 %v965, 2147483648
  %v978 = vor.u32 1.1754944e-38, %v977
  %v979 = vsel %vm976, %v978, %v974
  %v980 = vmul.f32 %v955, %v979
  %v981 = vmin.f32 %v980, 1.0
  %v982 = vmax.f32 %v981, -1.0
  %v983 = vmul.f32 %v655, %v655
  %v984 = vmin.f32 16.0, %v983
  %v985 = vmul.f32 %v984, 2.1237322e-06
  %v986 = vadd.f32 %v985, 0.00028619796
  %v987 = vmul.f32 %v984, %v986
  %v988 = vadd.f32 %v987, 0.0036580483
  %v989 = vmul.f32 %v984, %v988
  %v990 = vadd.f32 %v989, 0.05243302
  %v991 = vmul.f32 %v984, %v990
  %v992 = vadd.f32 %v991, 0.18741608
  %v993 = vmul.f32 %v984, %v992
  %v994 = vadd.f32 %v993, 1.1283791
  %v995 = vmul.f32 %v655, %v994
  %v996 = vmul.f32 %v984, 3.8918573e-05
  %v997 = vadd.f32 %v996, 0.001143296
  %v998 = vmul.f32 %v984, %v997
  %v999 = vadd.f32 %v998, 0.014752088
  %v1000 = vmul.f32 %v984, %v999
  %v1001 = vadd.f32 %v1000, 0.112945676
  %v1002 = vmul.f32 %v984, %v1001
  %v1003 = vadd.f32 %v1002, 0.4994258
  %v1004 = vmul.f32 %v984, %v1003
  %v1005 = vadd.f32 %v1004, 1.0
  %v1006 = vrcp.pop %v1005
  %v1007 = vmul.f32 %v1005, %v1006
  %v1008 = vsub.f32 1.0, %v1007
  %v1009 = vmul.f32 %v1006, %v1008
  %v1010 = vadd.f32 %v1006, %v1009
  %vm1011 = vweird.f32 %v1005
  %vm1012 = vweird.f32 %v1006
  %vm1013 = vmor %vm1011, %vm1012
  %v1014 = vsel %vm1013, %v1006, %v1010
  %v1015 = vand.u32 2147483647, %v1005
  %vm1016 = vcmp.eq.f32.partialorder %v1015, 8.507059e+37
  %v1017 = vand.u32 %v1005, 2147483648
  %v1018 = vor.u32 1.1754944e-38, %v1017
  %v1019 = vsel %vm1016, %v1018, %v1014
  %v1020 = vmul.f32 %v995, %v1019
  %v1021 = vmin.f32 %v1020, 1.0
  %v1022 = vmax.f32 %v1021, -1.0
  %v1023 = vmul.f32 %v656, %v656
  %v1024 = vmin.f32 16.0, %v1023
  %v1025 = vmul.f32 %v1024, 2.1237322e-06
  %v1026 = vadd.f32 %v1025, 0.00028619796
  %v1027 = vmul.f32 %v1024, %v1026
  %v1028 = vadd.f32 %v1027, 0.0036580483
  %v1029 = vmul.f32 %v1024, %v1028
  %v1030 = vadd.f32 %v1029, 0.05243302
  %v1031 = vmul.f32 %v1024, %v1030
  %v1032 = vadd.f32 %v1031, 0.18741608
  %v1033 = vmul.f32 %v1024, %v1032
  %v1034 = vadd.f32 %v1033, 1.1283791
  %v1035 = vmul.f32 %v656, %v1034
  %v1036 = vmul.f32 %v1024, 3.8918573e-05
  %v1037 = vadd.f32 %v1036, 0.001143296
  %v1038 = vmul.f32 %v1024, %v1037
  %v1039 = vadd.f32 %v1038, 0.014752088
  %v1040 = vmul.f32 %v1024, %v1039
  %v1041 = vadd.f32 %v1040, 0.112945676
  %v1042 = vmul.f32 %v1024, %v1041
  %v1043 = vadd.f32 %v1042, 0.4994258
  %v1044 = vmul.f32 %v1024, %v1043
  %v1045 = vadd.f32 %v1044, 1.0
  %v1046 = vrcp.pop %v1045
  %v1047 = vmul.f32 %v1045, %v1046
  %v1048 = vsub.f32 1.0, %v1047
  %v1049 = vmul.f32 %v1046, %v1048
  %v1050 = vadd.f32 %v1046, %v1049
  %vm1051 = vweird.f32 %v1045
  %vm1052 = vweird.f32 %v1046
  %vm1053 = vmor %vm1051, %vm1052
  %v1054 = vsel %vm1053, %v1046, %v1050
  %v1055 = vand.u32 2147483647, %v1045
  %vm1056 = vcmp.eq.f32.partialorder %v1055, 8.507059e+37
  %v1057 = vand.u32 %v1045, 2147483648
  %v1058 = vor.u32 1.1754944e-38, %v1057
  %v1059 = vsel %vm1056, %v1058, %v1054
  %v1060 = vmul.f32 %v1035, %v1059
  %v1061 = vmin.f32 %v1060, 1.0
  %v1062 = vmax.f32 %v1061, -1.0
  %v1063 = vmul.f32 %v657, %v657
  %v1064 = vmin.f32 16.0, %v1063
  %v1065 = vmul.f32 %v1064, 2.1237322e-06
  %v1066 = vadd.f32 %v1065, 0.00028619796
  %v1067 = vmul.f32 %v1064, %v1066
  %v1068 = vadd.f32 %v1067, 0.0036580483
  %v1069 = vmul.f32 %v1064, %v1068
  %v1070 = vadd.f32 %v1069, 0.05243302
  %v1071 = vmul.f32 %v1064, %v1070
  %v1072 = vadd.f32 %v1071, 0.18741608
  %v1073 = vmul.f32 %v1064, %v1072
  %v1074 = vadd.f32 %v1073, 1.1283791
  %v1075 = vmul.f32 %v657, %v1074
  %v1076 = vmul.f32 %v1064, 3.8918573e-05
  %v1077 = vadd.f32 %v1076, 0.001143296
  %v1078 = vmul.f32 %v1064, %v1077
  %v1079 = vadd.f32 %v1078, 0.014752088
  %v1080 = vmul.f32 %v1064, %v1079
  %v1081 = vadd.f32 %v1080, 0.112945676
  %v1082 = vmul.f32 %v1064, %v1081
  %v1083 = vadd.f32 %v1082, 0.4994258
  %v1084 = vmul.f32 %v1064, %v1083
  %v1085 = vadd.f32 %v1084, 1.0
  %v1086 = vrcp.pop %v1085
  %v1087 = vmul.f32 %v1085, %v1086
  %v1088 = vsub.f32 1.0, %v1087
  %v1089 = vmul.f32 %v1086, %v1088
  %v1090 = vadd.f32 %v1086, %v1089
  %vm1091 = vweird.f32 %v1085
  %vm1092 = vweird.f32 %v1086
  %vm1093 = vmor %vm1091, %vm1092
  %v1094 = vsel %vm1093, %v1086, %v1090
  %v1095 = vand.u32 2147483647, %v1085
  %vm1096 = vcmp.eq.f32.partialorder %v1095, 8.507059e+37
  %v1097 = vand.u32 %v1085, 2147483648
  %v1098 = vor.u32 1.1754944e-38, %v1097
  %v1099 = vsel %vm1096, %v1098, %v1094
  %v1100 = vmul.f32 %v1075, %v1099
  %v1101 = vmin.f32 %v1100, 1.0
  %v1102 = vmax.f32 %v1101, -1.0
  %v1103 = vmul.f32 %v658, %v658
  %v1104 = vmin.f32 16.0, %v1103
  %v1105 = vmul.f32 %v1104, 2.1237322e-06
  %v1106 = vadd.f32 %v1105, 0.00028619796
  %v1107 = vmul.f32 %v1104, %v1106
  %v1108 = vadd.f32 %v1107, 0.0036580483
  %v1109 = vmul.f32 %v1104, %v1108
  %v1110 = vadd.f32 %v1109, 0.05243302
  %v1111 = vmul.f32 %v1104, %v1110
  %v1112 = vadd.f32 %v1111, 0.18741608
  %v1113 = vmul.f32 %v1104, %v1112
  %v1114 = vadd.f32 %v1113, 1.1283791
  %v1115 = vmul.f32 %v658, %v1114
  %v1116 = vmul.f32 %v1104, 3.8918573e-05
  %v1117 = vadd.f32 %v1116, 0.001143296
  %v1118 = vmul.f32 %v1104, %v1117
  %v1119 = vadd.f32 %v1118, 0.014752088
  %v1120 = vmul.f32 %v1104, %v1119
  %v1121 = vadd.f32 %v1120, 0.112945676
  %v1122 = vmul.f32 %v1104, %v1121
  %v1123 = vadd.f32 %v1122, 0.4994258
  %v1124 = vmul.f32 %v1104, %v1123
  %v1125 = vadd.f32 %v1124, 1.0
  %v1126 = vrcp.pop %v1125
  %v1127 = vmul.f32 %v1125, %v1126
  %v1128 = vsub.f32 1.0, %v1127
  %v1129 = vmul.f32 %v1126, %v1128
  %v1130 = vadd.f32 %v1126, %v1129
  %vm1131 = vweird.f32 %v1125
  %vm1132 = vweird.f32 %v1126
  %vm1133 = vmor %vm1131, %vm1132
  %v1134 = vsel %vm1133, %v1126, %v1130
  %v1135 = vand.u32 2147483647, %v1125
  %vm1136 = vcmp.eq.f32.partialorder %v1135, 8.507059e+37
  %v1137 = vand.u32 %v1125, 2147483648
  %v1138 = vor.u32 1.1754944e-38, %v1137
  %v1139 = vsel %vm1136, %v1138, %v1134
  %v1140 = vmul.f32 %v1115, %v1139
  %v1141 = vmin.f32 %v1140, 1.0
  %v1142 = vmax.f32 %v1141, -1.0
  %v1143 = vmul.f32 %v659, %v659
  %v1144 = vmin.f32 16.0, %v1143
  %v1145 = vmul.f32 %v1144, 2.1237322e-06
  %v1146 = vadd.f32 %v1145, 0.00028619796
  %v1147 = vmul.f32 %v1144, %v1146
  %v1148 = vadd.f32 %v1147, 0.0036580483
  %v1149 = vmul.f32 %v1144, %v1148
  %v1150 = vadd.f32 %v1149, 0.05243302
  %v1151 = vmul.f32 %v1144, %v1150
  %v1152 = vadd.f32 %v1151, 0.18741608
  %v1153 = vmul.f32 %v1144, %v1152
  %v1154 = vadd.f32 %v1153, 1.1283791
  %v1155 = vmul.f32 %v659, %v1154
  %v1156 = vmul.f32 %v1144, 3.8918573e-05
  %v1157 = vadd.f32 %v1156, 0.001143296
  %v1158 = vmul.f32 %v1144, %v1157
  %v1159 = vadd.f32 %v1158, 0.014752088
  %v1160 = vmul.f32 %v1144, %v1159
  %v1161 = vadd.f32 %v1160, 0.112945676
  %v1162 = vmul.f32 %v1144, %v1161
  %v1163 = vadd.f32 %v1162, 0.4994258
  %v1164 = vmul.f32 %v1144, %v1163
  %v1165 = vadd.f32 %v1164, 1.0
  %v1166 = vrcp.pop %v1165
  %v1167 = vmul.f32 %v1165, %v1166
  %v1168 = vsub.f32 1.0, %v1167
  %v1169 = vmul.f32 %v1166, %v1168
  %v1170 = vadd.f32 %v1166, %v1169
  %vm1171 = vweird.f32 %v1165
  %vm1172 = vweird.f32 %v1166
  %vm1173 = vmor %vm1171, %vm1172
  %v1174 = vsel %vm1173, %v1166, %v1170
  %v1175 = vand.u32 2147483647, %v1165
  %vm1176 = vcmp.eq.f32.partialorder %v1175, 8.507059e+37
  %v1177 = vand.u32 %v1165, 2147483648
  %v1178 = vor.u32 1.1754944e-38, %v1177
  %v1179 = vsel %vm1176, %v1178, %v1174
  %v1180 = vmul.f32 %v1155, %v1179
  %v1181 = vmin.f32 %v1180, 1.0
  %v1182 = vmax.f32 %v1181, -1.0
  %v1183 = vmul.f32 %v660, %v660
  %v1184 = vmin.f32 16.0, %v1183
  %v1185 = vmul.f32 %v1184, 2.1237322e-06
  %v1186 = vadd.f32 %v1185, 0.00028619796
  %v1187 = vmul.f32 %v1184, %v1186
  %v1188 = vadd.f32 %v1187, 0.0036580483
  %v1189 = vmul.f32 %v1184, %v1188
  %v1190 = vadd.f32 %v1189, 0.05243302
  %v1191 = vmul.f32 %v1184, %v1190
  %v1192 = vadd.f32 %v1191, 0.18741608
  %v1193 = vmul.f32 %v1184, %v1192
  %v1194 = vadd.f32 %v1193, 1.1283791
  %v1195 = vmul.f32 %v660, %v1194
  %v1196 = vmul.f32 %v1184, 3.8918573e-05
  %v1197 = vadd.f32 %v1196, 0.001143296
  %v1198 = vmul.f32 %v1184, %v1197
  %v1199 = vadd.f32 %v1198, 0.014752088
  %v1200 = vmul.f32 %v1184, %v1199
  %v1201 = vadd.f32 %v1200, 0.112945676
  %v1202 = vmul.f32 %v1184, %v1201
  %v1203 = vadd.f32 %v1202, 0.4994258
  %v1204 = vmul.f32 %v1184, %v1203
  %v1205 = vadd.f32 %v1204, 1.0
  %v1206 = vrcp.pop %v1205
  %v1207 = vmul.f32 %v1205, %v1206
  %v1208 = vsub.f32 1.0, %v1207
  %v1209 = vmul.f32 %v1206, %v1208
  %v1210 = vadd.f32 %v1206, %v1209
  %vm1211 = vweird.f32 %v1205
  %vm1212 = vweird.f32 %v1206
  %vm1213 = vmor %vm1211, %vm1212
  %v1214 = vsel %vm1213, %v1206, %v1210
  %v1215 = vand.u32 2147483647, %v1205
  %vm1216 = vcmp.eq.f32.partialorder %v1215, 8.507059e+37
  %v1217 = vand.u32 %v1205, 2147483648
  %v1218 = vor.u32 1.1754944e-38, %v1217
  %v1219 = vsel %vm1216, %v1218, %v1214
  %v1220 = vmul.f32 %v1195, %v1219
  %v1221 = vmin.f32 %v1220, 1.0
  %v1222 = vmax.f32 %v1221, -1.0
  %v1223 = vmul.f32 %v661, %v661
  %v1224 = vmin.f32 16.0, %v1223
  %v1225 = vmul.f32 %v1224, 2.1237322e-06
  %v1226 = vadd.f32 %v1225, 0.00028619796
  %v1227 = vmul.f32 %v1224, %v1226
  %v1228 = vadd.f32 %v1227, 0.0036580483
  %v1229 = vmul.f32 %v1224, %v1228
  %v1230 = vadd.f32 %v1229, 0.05243302
  %v1231 = vmul.f32 %v1224, %v1230
  %v1232 = vadd.f32 %v1231, 0.18741608
  %v1233 = vmul.f32 %v1224, %v1232
  %v1234 = vadd.f32 %v1233, 1.1283791
  %v1235 = vmul.f32 %v661, %v1234
  %v1236 = vmul.f32 %v1224, 3.8918573e-05
  %v1237 = vadd.f32 %v1236, 0.001143296
  %v1238 = vmul.f32 %v1224, %v1237
  %v1239 = vadd.f32 %v1238, 0.014752088
  %v1240 = vmul.f32 %v1224, %v1239
  %v1241 = vadd.f32 %v1240, 0.112945676
  %v1242 = vmul.f32 %v1224, %v1241
  %v1243 = vadd.f32 %v1242, 0.4994258
  %v1244 = vmul.f32 %v1224, %v1243
  %v1245 = vadd.f32 %v1244, 1.0
  %v1246 = vrcp.pop %v1245
  %v1247 = vmul.f32 %v1245, %v1246
  %v1248 = vsub.f32 1.0, %v1247
  %v1249 = vmul.f32 %v1246, %v1248
  %v1250 = vadd.f32 %v1246, %v1249
  %vm1251 = vweird.f32 %v1245
  %vm1252 = vweird.f32 %v1246
  %vm1253 = vmor %vm1251, %vm1252
  %v1254 = vsel %vm1253, %v1246, %v1250
  %v1255 = vand.u32 2147483647, %v1245
  %vm1256 = vcmp.eq.f32.partialorder %v1255, 8.507059e+37
  %v1257 = vand.u32 %v1245, 2147483648
  %v1258 = vor.u32 1.1754944e-38, %v1257
  %v1259 = vsel %vm1256, %v1258, %v1254
  %v1260 = vmul.f32 %v1235, %v1259
  %v1261 = vmin.f32 %v1260, 1.0
  %v1262 = vmax.f32 %v1261, -1.0
  %v1263 = vmul.f32 %v662, %v662
  %v1264 = vmin.f32 16.0, %v1263
  %v1265 = vmul.f32 %v1264, 2.1237322e-06
  %v1266 = vadd.f32 %v1265, 0.00028619796
  %v1267 = vmul.f32 %v1264, %v1266
  %v1268 = vadd.f32 %v1267, 0.0036580483
  %v1269 = vmul.f32 %v1264, %v1268
  %v1270 = vadd.f32 %v1269, 0.05243302
  %v1271 = vmul.f32 %v1264, %v1270
  %v1272 = vadd.f32 %v1271, 0.18741608
  %v1273 = vmul.f32 %v1264, %v1272
  %v1274 = vadd.f32 %v1273, 1.1283791
  %v1275 = vmul.f32 %v662, %v1274
  %v1276 = vmul.f32 %v1264, 3.8918573e-05
  %v1277 = vadd.f32 %v1276, 0.001143296
  %v1278 = vmul.f32 %v1264, %v1277
  %v1279 = vadd.f32 %v1278, 0.014752088
  %v1280 = vmul.f32 %v1264, %v1279
  %v1281 = vadd.f32 %v1280, 0.112945676
  %v1282 = vmul.f32 %v1264, %v1281
  %v1283 = vadd.f32 %v1282, 0.4994258
  %v1284 = vmul.f32 %v1264, %v1283
  %v1285 = vadd.f32 %v1284, 1.0
  %v1286 = vrcp.pop %v1285
  %v1287 = vmul.f32 %v1285, %v1286
  %v1288 = vsub.f32 1.0, %v1287
  %v1289 = vmul.f32 %v1286, %v1288
  %v1290 = vadd.f32 %v1286, %v1289
  %vm1291 = vweird.f32 %v1285
  %vm1292 = vweird.f32 %v1286
  %vm1293 = vmor %vm1291, %vm1292
  %v1294 = vsel %vm1293, %v1286, %v1290
  %v1295 = vand.u32 2147483647, %v1285
  %vm1296 = vcmp.eq.f32.partialorder %v1295, 8.507059e+37
  %v1297 = vand.u32 %v1285, 2147483648
  %v1298 = vor.u32 1.1754944e-38, %v1297
  %v1299 = vsel %vm1296, %v1298, %v1294
  %v1300 = vmul.f32 %v1275, %v1299
  %v1301 = vmin.f32 %v1300, 1.0
  %v1302 = vmax.f32 %v1301, -1.0
  %v1303 = vadd.f32 %v702, 1.0
  %v1304 = vadd.f32 %v742, 1.0
  %v1305 = vadd.f32 %v782, 1.0
  %v1306 = vadd.f32 %v822, 1.0
  %v1307 = vadd.f32 %v862, 1.0
  %v1308 = vadd.f32 %v902, 1.0
  %v1309 = vadd.f32 %v942, 1.0
  %v1310 = vadd.f32 %v982, 1.0
  %v1311 = vadd.f32 %v1022, 1.0
  %v1312 = vadd.f32 %v1062, 1.0
  %v1313 = vadd.f32 %v1102, 1.0
  %v1314 = vadd.f32 %v1142, 1.0
  %v1315 = vadd.f32 %v1182, 1.0
  %v1316 = vadd.f32 %v1222, 1.0
  %v1317 = vadd.f32 %v1262, 1.0
  %v1318 = vadd.f32 %v1302, 1.0
  %v1319 = vmul.f32 %v631, %v1303
  %v1320 = vmul.f32 %v632, %v1304
  %v1321 = vmul.f32 %v633, %v1305
  %v1322 = vmul.f32 %v634, %v1306
  %v1323 = vmul.f32 %v635, %v1307
  %v1324 = vmul.f32 %v636, %v1308
  %v1325 = vmul.f32 %v637, %v1309
  %v1326 = vmul.f32 %v638, %v1310
  %v1327 = vmul.f32 %v639, %v1311
  %v1328 = vmul.f32 %v640, %v1312
  %v1329 = vmul.f32 %v641, %v1313
  %v1330 = vmul.f32 %v642, %v1314
  %v1331 = vmul.f32 %v643, %v1315
  %v1332 = vmul.f32 %v644, %v1316
  %v1333 = vmul.f32 %v645, %v1317
  %v1334 = vmul.f32 %v646, %v1318
  %v1335 = vpack.c.bf16 %v1320, %v1319
  %v1336 = vpack.c.bf16 %v1322, %v1321
  %v1337 = vpack.c.bf16 %v1324, %v1323
  %v1338 = vpack.c.bf16 %v1326, %v1325
  %v1339 = vpack.c.bf16 %v1328, %v1327
  %v1340 = vpack.c.bf16 %v1330, %v1329
  %v1341 = vpack.c.bf16 %v1332, %v1331
  %v1342 = vpack.c.bf16 %v1334, %v1333
  %v1343 = vld [vmem:[%s5] sm:$0xff]
  %v1344 = vld [vmem:[%s5 + $0x8] sm:$0xff]
  %v1345 = vld [vmem:[%s5 + $0x10] sm:$0xff]
  %v1346 = vld [vmem:[%s5 + $0x18] sm:$0xff]
  %v1347 = vld [vmem:[%s5 + $0x20] sm:$0xff]
  %v1348 = vld [vmem:[%s5 + $0x28] sm:$0xff]
  %v1349 = vld [vmem:[%s5 + $0x30] sm:$0xff]
  %v1350 = vld [vmem:[%s5 + $0x38] sm:$0xff]
  %v1351 = vpack.c.bf16 %v1344, %v1343
  %v1352 = vpack.c.bf16 %v1346, %v1345
  %v1353 = vpack.c.bf16 %v1348, %v1347
  %v1354 = vpack.c.bf16 %v1350, %v1349
  %v1355 = vld [vmem:[%s6] sm:$0x1]
  %v1357 = vperm.slane %v1355, 0
  %vm1359 = vcmask 523264
  %v1361 = vsel %vm1359, %v1335, 0
  %v1364 = vsel %vm1359, %v1336, 0
  %v1367 = vsel %vm1359, %v1337, 0
  %v1370 = vsel %vm1359, %v1338, 0
  %v1373 = vsel %vm1359, %v1339, 0
  %v1376 = vsel %vm1359, %v1340, 0
  %v1379 = vsel %vm1359, %v1341, 0
  %v1382 = vsel %vm1359, %v1342, 0
  %1384 = vmatpush.bf16.msra.mxu0 0
  %1385 = vmatpush.bf16.msra.mxu0 0
  %1386 = vmatpush.bf16.msra.mxu0 0
  %1387 = vmatpush.bf16.msra.mxu0 0
  %1388 = vmatpush.bf16.msra.mxu0 %v1354
  %1389 = vmatpush.bf16.msra.mxu0 %v1353
  %1390 = vmatpush.bf16.msra.mxu0 %v1352
  %1391 = vmatpush.bf16.msra.mxu0 %v1351
  %1392 = vmatmul.bf16.gmra.mxu0 %v1361
  %v1393 = vpop.f32.mrf.mxu0
  %v1394 = vadd.f32 %v1357, %v1393
  %v1395 = vpop.f32.mrf.mxu0
  %v1396 = vadd.f32 %v1357, %v1395
  %1397 = vmatmul.bf16.gmra.mxu0 %v1364
  %v1398 = vpop.f32.mrf.mxu0
  %v1399 = vadd.f32 %v1357, %v1398
  %v1400 = vpop.f32.mrf.mxu0
  %v1401 = vadd.f32 %v1357, %v1400
  %1402 = vmatmul.bf16.gmra.mxu0 %v1367
  %v1403 = vpop.f32.mrf.mxu0
  %v1404 = vadd.f32 %v1357, %v1403
  %v1405 = vpop.f32.mrf.mxu0
  %v1406 = vadd.f32 %v1357, %v1405
  %1407 = vmatmul.bf16.gmra.mxu0 %v1370
  %v1408 = vpop.f32.mrf.mxu0
  %v1409 = vadd.f32 %v1357, %v1408
  %v1410 = vpop.f32.mrf.mxu0
  %v1411 = vadd.f32 %v1357, %v1410
  %1412 = vmatmul.bf16.gmra.mxu0 %v1373
  %v1413 = vpop.f32.mrf.mxu0
  %v1414 = vadd.f32 %v1357, %v1413
  %v1415 = vpop.f32.mrf.mxu0
  %v1416 = vadd.f32 %v1357, %v1415
  %1417 = vmatmul.bf16.gmra.mxu0 %v1376
  %v1418 = vpop.f32.mrf.mxu0
  %v1419 = vadd.f32 %v1357, %v1418
  %v1420 = vpop.f32.mrf.mxu0
  %v1421 = vadd.f32 %v1357, %v1420
  %1422 = vmatmul.bf16.gmra.mxu0 %v1379
  %v1423 = vpop.f32.mrf.mxu0
  %v1424 = vadd.f32 %v1357, %v1423
  %v1425 = vpop.f32.mrf.mxu0
  %v1426 = vadd.f32 %v1357, %v1425
  %1427 = vmatmul.bf16.gmra.mxu0 %v1382
  %v1428 = vpop.f32.mrf.mxu0
  %v1429 = vadd.f32 %v1357, %v1428
  %v1430 = vpop.f32.mrf.mxu0
  %v1431 = vadd.f32 %v1357, %v1430
  %1432 = vdwg.mxu0
  %v1433 = vadd.f32 %v102, %v1394
  %v1434 = vadd.f32 %v104, %v1396
  %v1435 = vadd.f32 %v107, %v1399
  %v1436 = vadd.f32 %v109, %v1401
  %v1437 = vadd.f32 %v112, %v1404
  %v1438 = vadd.f32 %v114, %v1406
  %v1439 = vadd.f32 %v117, %v1409
  %v1440 = vadd.f32 %v119, %v1411
  %v1441 = vadd.f32 %v122, %v1414
  %v1442 = vadd.f32 %v124, %v1416
  %v1443 = vadd.f32 %v127, %v1419
  %v1444 = vadd.f32 %v129, %v1421
  %v1445 = vadd.f32 %v132, %v1424
  %v1446 = vadd.f32 %v134, %v1426
  %v1447 = vadd.f32 %v137, %v1429
  %v1448 = vadd.f32 %v139, %v1431
  %1449 = vst.msk [vmem:[%s9] sm:$0xff] %vm67, %v1433
  %1450 = vst.msk [vmem:[%s9 + $0x8] sm:$0xff] %vm67, %v1434
  %1451 = vst.msk [vmem:[%s9 + $0x10] sm:$0xff] %vm67, %v1435
  %1452 = vst.msk [vmem:[%s9 + $0x18] sm:$0xff] %vm67, %v1436
  %1453 = vst.msk [vmem:[%s9 + $0x20] sm:$0xff] %vm67, %v1437
  %1454 = vst.msk [vmem:[%s9 + $0x28] sm:$0xff] %vm67, %v1438
  %1455 = vst.msk [vmem:[%s9 + $0x30] sm:$0xff] %vm67, %v1439
  %1456 = vst.msk [vmem:[%s9 + $0x38] sm:$0xff] %vm67, %v1440
  %1457 = vst.msk [vmem:[%s9 + $0x40] sm:$0xff] %vm67, %v1441
  %1458 = vst.msk [vmem:[%s9 + $0x48] sm:$0xff] %vm67, %v1442
  %1459 = vst.msk [vmem:[%s9 + $0x50] sm:$0xff] %vm67, %v1443
  %1460 = vst.msk [vmem:[%s9 + $0x58] sm:$0xff] %vm67, %v1444
  %1461 = vst.msk [vmem:[%s9 + $0x60] sm:$0xff] %vm67, %v1445
  %1462 = vst.msk [vmem:[%s9 + $0x68] sm:$0xff] %vm67, %v1446
  %1463 = vst.msk [vmem:[%s9 + $0x70] sm:$0xff] %vm67, %v1447
  %1464 = vst.msk [vmem:[%s9 + $0x78] sm:$0xff] %vm67, %v1448
  // Predicated region
  $region38: #{transformer_encoder_multiscale.3} parent=0 // pred_check
    _
  $region39: #{transformer_encoder_multiscale.3} parent=0 // pred_check_branch
    %1466 = sbr.rel (0) target = $region41
  $region40: #{transformer_encoder_multiscale.3} parent=0 // pred_region
    _
  $region41: #{transformer_encoder_multiscale.3} parent=0 // pred_fallthru
    _
  // Predicated region
  $region42: #{transformer_encoder_multiscale.3} parent=0 // pred_check
    _
  $region43: #{transformer_encoder_multiscale.3} parent=0 // pred_check_branch
    %1468 = sbr.rel (0) target = $region45
  $region44: #{transformer_encoder_multiscale.3} parent=0 // pred_region
    _
  $region45: #{transformer_encoder_multiscale.3} parent=0 // pred_fallthru
    _

// kernel: transformer_encoder_multiscale.2
$region0: #{transformer_encoder_multiscale.2}
  #allocation0 [shape = 'u32[]', space=smem, size = 0x4, offset = 0x4, fixed_abs, tag = 'smem constant byte address 0x4 - core index']
  #allocation1 [shape = 'u32[72,128]{1,0:T(1,128)}', space=vmem, size = 0x9000, scoped, tag = 'internal scratch']
  %s0 = inlined_call_operand.vmem [shape: f32[2,64,32], index: 0, kind: input, shape index: {}]
  %s1 = inlined_call_operand.vmem [shape: f32[1,32], index: 1, kind: input, shape index: {}]
  %s2 = inlined_call_operand.vmem [shape: f32[1,32], index: 2, kind: input, shape index: {}]
  %s3 = inlined_call_operand.vmem [shape: f32[32,96], index: 3, kind: input, shape index: {}]
  %s4 = inlined_call_operand.vmem [shape: f32[1,96], index: 4, kind: input, shape index: {}]
  %s5 = inlined_call_operand.vmem [shape: f32[32,32], index: 5, kind: input, shape index: {}]
  %s6 = inlined_call_operand.vmem [shape: f32[1,32], index: 6, kind: input, shape index: {}]
  %s7 = inlined_call_operand.vmem [shape: f32[1,32], index: 7, kind: input, shape index: {}]
  %s8 = inlined_call_operand.vmem [shape: f32[2,64,32], index: 8, kind: output, shape index: {}]
  %s9 = sld [smem:[#allocation0]]
  $region65: #{transformer_encoder_multiscale.2} parent=0
    _
  %s11 = ssub.s32 1, %s9
  %s12 = scalar_select 0, %s11, %s9
  loop: start=0, step=1, limit=4
  $region2: #{transformer_encoder_multiscale.2} parent=0 // loop_pre_header
    _
  $region3: #{transformer_encoder_multiscale.2} parent=0 // loop_header
    %s14 = sphi 0, %s18
    %p15 = scmp.ge.s32.totalorder %s14, 4
    %s24 = sphi 0, %s26
    %s27 = sphi 0, %s24
    %s28 = sphi 0, %s27
    %s44 = sphi 0, %s28
    %s48 = sphi 0, %s48
    %s50 = sphi 0, %s48
    %s51 = sphi 0, %s50
    %s65 = sphi 0, %s51
    %s69 = sphi 0, %s69
    %s71 = sphi 0, %s69
    %s72 = sphi 0, %s71
    %s86 = sphi 0, %s72
    %s90 = sphi 0, %s90
    %s92 = sphi 0, %s90
    %s93 = sphi 0, %s92
    %s107 = sphi 0, %s93
    %s111 = sphi 0, %s111
    %s113 = sphi 0, %s111
    %s114 = sphi 0, %s113
    %s128 = sphi 0, %s114
    %s132 = sphi 0, %s132
    %s134 = sphi 0, %s132
    %s135 = sphi 0, %s134
    %s149 = sphi 0, %s135
    %s153 = sphi 0, %s153
    %s155 = sphi 0, %s153
    %s156 = sphi 0, %s155
    %s170 = sphi 0, %s156
    %s174 = sphi 0, %s174
    %s176 = sphi 0, %s174
    %s177 = sphi 0, %s176
    %s191 = sphi 0, %s177
    %s197 = sphi 0, %s199
    %s200 = sphi 0, %s197
    %s201 = sphi 0, %s200
    %s217 = sphi 0, %s201
  $region4: #{transformer_encoder_multiscale.2} parent=0 // loop_header_branch
    %17 = sbr.rel (%p15) target = $region8
  $region5: #{transformer_encoder_multiscale.2} parent=0 // loop_body
    %s19 = ssub.s32 %s14, 1
    %s20 = ssub.s32 %s14, 2
    %s21 = sadd.s32 %s14, 1
    %s22 = ssub.s32 %s14, %s21
    %p23 = scmp.eq.s32.totalorder %s22, 0
    %s25 = sadd.s32 %s24, 1
    %s26 = scalar_select %p23, %s24, %s25
    %p29 = pneg %p23
    %p30 = scmp.eq.s32.totalorder %s14, 1
    %p31 = por %p29, %p30
    %p32 = scmp.ne.s32.totalorder %s24, %s27
    %p33 = scmp.eq.s32.totalorder %s14, 0
    %p34 = por %p32, %p33
    %p35 = scmp.ne.s32.totalorder %s24, %s27
    %p36 = scmp.eq.s32.totalorder %s19, 1
    %p37 = por %p35, %p36
    %p38 = scmp.ne.s32.totalorder %s27, %s28
    %p39 = scmp.eq.s32.totalorder %s19, 0
    %p40 = por %p38, %p39
    %p41 = scmp.ne.s32.totalorder %s27, %s28
    %p42 = scmp.eq.s32.totalorder %s20, 1
    %p43 = por %p41, %p42
    %p45 = scmp.ne.s32.totalorder %s28, %s44
    %p46 = scmp.eq.s32.totalorder %s20, 0
    %p47 = por %p45, %p46
    %s49 = sadd.s32 %s48, 1
    %p52 = scmp.eq.s32.totalorder %s14, 1
    %p53 = scmp.ne.s32.totalorder %s48, %s50
    %p54 = scmp.eq.s32.totalorder %s14, 0
    %p55 = por %p53, %p54
    %p56 = scmp.ne.s32.totalorder %s48, %s50
    %p57 = scmp.eq.s32.totalorder %s19, 1
    %p58 = por %p56, %p57
    %p59 = scmp.ne.s32.totalorder %s50, %s51
    %p60 = scmp.eq.s32.totalorder %s19, 0
    %p61 = por %p59, %p60
    %p62 = scmp.ne.s32.totalorder %s50, %s51
    %p63 = scmp.eq.s32.totalorder %s20, 1
    %p64 = por %p62, %p63
    %p66 = scmp.ne.s32.totalorder %s51, %s65
    %p67 = scmp.eq.s32.totalorder %s20, 0
    %p68 = por %p66, %p67
    %s70 = sadd.s32 %s69, 1
    %p73 = scmp.eq.s32.totalorder %s14, 1
    %p74 = scmp.ne.s32.totalorder %s69, %s71
    %p75 = scmp.eq.s32.totalorder %s14, 0
    %p76 = por %p74, %p75
    %p77 = scmp.ne.s32.totalorder %s69, %s71
    %p78 = scmp.eq.s32.totalorder %s19, 1
    %p79 = por %p77, %p78
    %p80 = scmp.ne.s32.totalorder %s71, %s72
    %p81 = scmp.eq.s32.totalorder %s19, 0
    %p82 = por %p80, %p81
    %p83 = scmp.ne.s32.totalorder %s71, %s72
    %p84 = scmp.eq.s32.totalorder %s20, 1
    %p85 = por %p83, %p84
    %p87 = scmp.ne.s32.totalorder %s72, %s86
    %p88 = scmp.eq.s32.totalorder %s20, 0
    %p89 = por %p87, %p88
    %s91 = sadd.s32 %s90, 1
    %p94 = scmp.eq.s32.totalorder %s14, 1
    %p95 = scmp.ne.s32.totalorder %s90, %s92
    %p96 = scmp.eq.s32.totalorder %s14, 0
    %p97 = por %p95, %p96
    %p98 = scmp.ne.s32.totalorder %s90, %s92
    %p99 = scmp.eq.s32.totalorder %s19, 1
    %p100 = por %p98, %p99
    %p101 = scmp.ne.s32.totalorder %s92, %s93
    %p102 = scmp.eq.s32.totalorder %s19, 0
    %p103 = por %p101, %p102
    %p104 = scmp.ne.s32.totalorder %s92, %s93
    %p105 = scmp.eq.s32.totalorder %s20, 1
    %p106 = por %p104, %p105
    %p108 = scmp.ne.s32.totalorder %s93, %s107
    %p109 = scmp.eq.s32.totalorder %s20, 0
    %p110 = por %p108, %p109
    %s112 = sadd.s32 %s111, 1
    %p115 = scmp.eq.s32.totalorder %s14, 1
    %p116 = scmp.ne.s32.totalorder %s111, %s113
    %p117 = scmp.eq.s32.totalorder %s14, 0
    %p118 = por %p116, %p117
    %p119 = scmp.ne.s32.totalorder %s111, %s113
    %p120 = scmp.eq.s32.totalorder %s19, 1
    %p121 = por %p119, %p120
    %p122 = scmp.ne.s32.totalorder %s113, %s114
    %p123 = scmp.eq.s32.totalorder %s19, 0
    %p124 = por %p122, %p123
    %p125 = scmp.ne.s32.totalorder %s113, %s114
    %p126 = scmp.eq.s32.totalorder %s20, 1
    %p127 = por %p125, %p126
    %p129 = scmp.ne.s32.totalorder %s114, %s128
    %p130 = scmp.eq.s32.totalorder %s20, 0
    %p131 = por %p129, %p130
    %s133 = sadd.s32 %s132, 1
    %p136 = scmp.eq.s32.totalorder %s14, 1
    %p137 = scmp.ne.s32.totalorder %s132, %s134
    %p138 = scmp.eq.s32.totalorder %s14, 0
    %p139 = por %p137, %p138
    %p140 = scmp.ne.s32.totalorder %s132, %s134
    %p141 = scmp.eq.s32.totalorder %s19, 1
    %p142 = por %p140, %p141
    %p143 = scmp.ne.s32.totalorder %s134, %s135
    %p144 = scmp.eq.s32.totalorder %s19, 0
    %p145 = por %p143, %p144
    %p146 = scmp.ne.s32.totalorder %s134, %s135
    %p147 = scmp.eq.s32.totalorder %s20, 1
    %p148 = por %p146, %p147
    %p150 = scmp.ne.s32.totalorder %s135, %s149
    %p151 = scmp.eq.s32.totalorder %s20, 0
    %p152 = por %p150, %p151
    %s154 = sadd.s32 %s153, 1
    %p157 = scmp.eq.s32.totalorder %s14, 1
    %p158 = scmp.ne.s32.totalorder %s153, %s155
    %p159 = scmp.eq.s32.totalorder %s14, 0
    %p160 = por %p158, %p159
    %p161 = scmp.ne.s32.totalorder %s153, %s155
    %p162 = scmp.eq.s32.totalorder %s19, 1
    %p163 = por %p161, %p162
    %p164 = scmp.ne.s32.totalorder %s155, %s156
    %p165 = scmp.eq.s32.totalorder %s19, 0
    %p166 = por %p164, %p165
    %p167 = scmp.ne.s32.totalorder %s155, %s156
    %p168 = scmp.eq.s32.totalorder %s20, 1
    %p169 = por %p167, %p168
    %p171 = scmp.ne.s32.totalorder %s156, %s170
    %p172 = scmp.eq.s32.totalorder %s20, 0
    %p173 = por %p171, %p172
    %s175 = sadd.s32 %s174, 1
    %p178 = scmp.eq.s32.totalorder %s14, 1
    %p179 = scmp.ne.s32.totalorder %s174, %s176
    %p180 = scmp.eq.s32.totalorder %s14, 0
    %p181 = por %p179, %p180
    %p182 = scmp.ne.s32.totalorder %s174, %s176
    %p183 = scmp.eq.s32.totalorder %s19, 1
    %p184 = por %p182, %p183
    %p185 = scmp.ne.s32.totalorder %s176, %s177
    %p186 = scmp.eq.s32.totalorder %s19, 0
    %p187 = por %p185, %p186
    %p188 = scmp.ne.s32.totalorder %s176, %s177
    %p189 = scmp.eq.s32.totalorder %s20, 1
    %p190 = por %p188, %p189
    %p192 = scmp.ne.s32.totalorder %s177, %s191
    %p193 = scmp.eq.s32.totalorder %s20, 0
    %p194 = por %p192, %p193
    %s195 = ssub.s32 %s14, %s21
    %p196 = scmp.eq.s32.totalorder %s195, 0
    %s198 = sadd.s32 %s197, 1
    %s199 = scalar_select %p196, %s197, %s198
    %p202 = pneg %p196
    %p203 = scmp.eq.s32.totalorder %s14, 1
    %p204 = por %p202, %p203
    %p205 = scmp.ne.s32.totalorder %s197, %s200
    %p206 = scmp.eq.s32.totalorder %s14, 0
    %p207 = por %p205, %p206
    %p208 = scmp.ne.s32.totalorder %s197, %s200
    %p209 = scmp.eq.s32.totalorder %s19, 1
    %p210 = por %p208, %p209
    %p211 = scmp.ne.s32.totalorder %s200, %s201
    %p212 = scmp.eq.s32.totalorder %s19, 0
    %p213 = por %p211, %p212
    %p214 = scmp.ne.s32.totalorder %s200, %s201
    %p215 = scmp.eq.s32.totalorder %s20, 1
    %p216 = por %p214, %p215
    %p218 = scmp.ne.s32.totalorder %s201, %s217
    %p219 = scmp.eq.s32.totalorder %s20, 0
    %p220 = por %p218, %p219
    %p221 = scmp.le.s32.totalorder 1, %s14
    %p222 = scmp.lt.s32.totalorder %s14, 3
    %p223 = pnand %p221, %p222
    %p224 = pneg %p223
    // Predicated region
    $region9: #{transformer_encoder_multiscale.2} parent=5 // pred_check
      _
    $region10: #{transformer_encoder_multiscale.2} parent=5 // pred_check_branch
      %226 = sbr.rel (%p223) target = $region12
    $region11: #{transformer_encoder_multiscale.2} parent=5 // pred_region
      %s227 = ssub.s32 %s14, 1
      // Predicated region
      $region13: #{transformer_encoder_multiscale.2} parent=11 // pred_check
        %p228 = pneg %p61
      $region14: #{transformer_encoder_multiscale.2} parent=11 // pred_check_branch
        %230 = sbr.rel (%p228) target = $region16
      $region15: #{transformer_encoder_multiscale.2} parent=11 // pred_region
        _
      $region16: #{transformer_encoder_multiscale.2} parent=11 // pred_fallthru
        _
      // Predicated region
      $region17: #{transformer_encoder_multiscale.2} parent=11 // pred_check
        %p231 = pneg %p82
      $region18: #{transformer_encoder_multiscale.2} parent=11 // pred_check_branch
        %233 = sbr.rel (%p231) target = $region20
      $region19: #{transformer_encoder_multiscale.2} parent=11 // pred_region
        _
      $region20: #{transformer_encoder_multiscale.2} parent=11 // pred_fallthru
        _
      // Predicated region
      $region21: #{transformer_encoder_multiscale.2} parent=11 // pred_check
        %p234 = pneg %p103
      $region22: #{transformer_encoder_multiscale.2} parent=11 // pred_check_branch
        %236 = sbr.rel (%p234) target = $region24
      $region23: #{transformer_encoder_multiscale.2} parent=11 // pred_region
        _
      $region24: #{transformer_encoder_multiscale.2} parent=11 // pred_fallthru
        _
      // Predicated region
      $region25: #{transformer_encoder_multiscale.2} parent=11 // pred_check
        %p237 = pneg %p124
      $region26: #{transformer_encoder_multiscale.2} parent=11 // pred_check_branch
        %239 = sbr.rel (%p237) target = $region28
      $region27: #{transformer_encoder_multiscale.2} parent=11 // pred_region
        _
      $region28: #{transformer_encoder_multiscale.2} parent=11 // pred_fallthru
        _
      // Predicated region
      $region29: #{transformer_encoder_multiscale.2} parent=11 // pred_check
        %p240 = pneg %p145
      $region30: #{transformer_encoder_multiscale.2} parent=11 // pred_check_branch
        %242 = sbr.rel (%p240) target = $region32
      $region31: #{transformer_encoder_multiscale.2} parent=11 // pred_region
        _
      $region32: #{transformer_encoder_multiscale.2} parent=11 // pred_fallthru
        _
      // Predicated region
      $region33: #{transformer_encoder_multiscale.2} parent=11 // pred_check
        %p243 = pneg %p166
      $region34: #{transformer_encoder_multiscale.2} parent=11 // pred_check_branch
        %245 = sbr.rel (%p243) target = $region36
      $region35: #{transformer_encoder_multiscale.2} parent=11 // pred_region
        _
      $region36: #{transformer_encoder_multiscale.2} parent=11 // pred_fallthru
        _
      // Predicated region
      $region37: #{transformer_encoder_multiscale.2} parent=11 // pred_check
        %p246 = pneg %p187
      $region38: #{transformer_encoder_multiscale.2} parent=11 // pred_check_branch
        %248 = sbr.rel (%p246) target = $region40
      $region39: #{transformer_encoder_multiscale.2} parent=11 // pred_region
        _
      $region40: #{transformer_encoder_multiscale.2} parent=11 // pred_fallthru
        _
    $region12: #{transformer_encoder_multiscale.2} parent=5 // pred_fallthru
      _
    %p249 = scmp.lt.s32.totalorder %s14, 2
    // Predicated region
    $region41: #{transformer_encoder_multiscale.2} parent=5 // pred_check
      %p250 = pneg %p249
    $region42: #{transformer_encoder_multiscale.2} parent=5 // pred_check_branch
      %252 = sbr.rel (%p250) target = $region44
    $region43: #{transformer_encoder_multiscale.2} parent=5 // pred_region
      // Predicated region
      $region45: #{transformer_encoder_multiscale.2} parent=43 // pred_check
        %p253 = pneg %p34
      $region46: #{transformer_encoder_multiscale.2} parent=43 // pred_check_branch
        %255 = sbr.rel (%p253) target = $region48
      $region47: #{transformer_encoder_multiscale.2} parent=43 // pred_region
        %p256 = scmp.lt.s32.totalorder %s14, 1
        %s257 = scalar_select %p256, %s14, 1
        %s258 = smul.addr %s257, 8
        %s259 = smul.addr %s258, 8
        %s260 = scalar_lea.vmem %s0, %s259
      $region48: #{transformer_encoder_multiscale.2} parent=43 // pred_fallthru
        _
    $region44: #{transformer_encoder_multiscale.2} parent=5 // pred_fallthru
      _
    %p261 = scmp.le.s32.totalorder 1, %s14
    %p262 = scmp.lt.s32.totalorder %s14, 3
    %p263 = pnand %p261, %p262
    %p264 = pneg %p263
    // Predicated region
    $region49: #{transformer_encoder_multiscale.2} parent=5 // pred_check
      _
    $region50: #{transformer_encoder_multiscale.2} parent=5 // pred_check_branch
      %266 = sbr.rel (%p263) target = $region52
    $region51: #{transformer_encoder_multiscale.2} parent=5 // pred_region
      %s267 = ssub.s32 %s14, 1
      %p268 = scmp.lt.s32.totalorder %s19, 1
      %s269 = scalar_select %p268, %s19, 1
      %s270 = smul.addr %s269, 8
      %s271 = smul.addr %s270, 8
      %s272 = scalar_lea.vmem %s0, %s271
      %p273 = pneg %p40
      %p274 = pneg %p37
      %p275 = pneg %p61
      %p276 = pneg %p58
      %p277 = pneg %p82
      %p278 = pneg %p79
      %p279 = pneg %p103
      %p280 = pneg %p100
      %p281 = pneg %p124
      %p282 = pneg %p121
      %p283 = pneg %p145
      %p284 = pneg %p142
      %p285 = pneg %p166
      %p286 = pneg %p163
      %p287 = pneg %p187
      %p288 = pneg %p184
      %p289 = pneg %p213
      %p290 = pneg %p210
      %p291 = scmp.lt.s32.totalorder %s19, 1
      %s292 = scalar_select %p291, %s19, 1
      %s293 = smul.addr %s292, 8
      %s294 = smul.addr %s293, 8
      %s295 = scalar_lea.vmem %s8, %s294
      %p296 = scmp.lt.s32.totalorder %s19, 1
      %s297 = scalar_select %p296, %s19, 1
      %s298 = smul.addr %s297, 8
      %s299 = smul.addr %s298, 8
      %s300 = scalar_lea.vmem %s0, %s299
      %p301 = scmp.lt.s32.totalorder %s19, 1
      %s302 = scalar_select %p301, %s19, 1
      %s303 = smul.addr %s302, 8
      %s304 = smul.addr %s303, 8
      %s305 = scalar_lea.vmem %s8, %s304
      %v307 = vld [vmem:[%s300] sm:$0xff]
      %v308 = vld [vmem:[%s300 + $0x8] sm:$0xff]
      %v309 = vld [vmem:[%s300 + $0x10] sm:$0xff]
      %v310 = vld [vmem:[%s300 + $0x18] sm:$0xff]
      %v311 = vld [vmem:[%s300 + $0x20] sm:$0xff]
      %v312 = vld [vmem:[%s300 + $0x28] sm:$0xff]
      %v313 = vld [vmem:[%s300 + $0x30] sm:$0xff]
      %v314 = vld [vmem:[%s300 + $0x38] sm:$0xff]
      %vm315 = vcmask 261120
      %v316 = vsel %vm315, %v307, 0.0
      %317 = vadd.xlane.f32.xlu0 %v316
      %v318 = vpop.xlane.xlu0 %317
      %v319 = vsel %vm315, %v308, 0.0
      %320 = vadd.xlane.f32.xlu0 %v319
      %v321 = vpop.xlane.xlu0 %320
      %v322 = vsel %vm315, %v309, 0.0
      %323 = vadd.xlane.f32.xlu0 %v322
      %v324 = vpop.xlane.xlu0 %323
      %v325 = vsel %vm315, %v310, 0.0
      %326 = vadd.xlane.f32.xlu0 %v325
      %v327 = vpop.xlane.xlu0 %326
      %v328 = vsel %vm315, %v311, 0.0
      %329 = vadd.xlane.f32.xlu0 %v328
      %v330 = vpop.xlane.xlu0 %329
      %v331 = vsel %vm315, %v312, 0.0
      %332 = vadd.xlane.f32.xlu0 %v331
      %v333 = vpop.xlane.xlu0 %332
      %v334 = vsel %vm315, %v313, 0.0
      %335 = vadd.xlane.f32.xlu0 %v334
      %v336 = vpop.xlane.xlu0 %335
      %v337 = vsel %vm315, %v314, 0.0
      %338 = vadd.xlane.f32.xlu0 %v337
      %v339 = vpop.xlane.xlu0 %338
      %v340 = vrcp.pop 32.0
      %v341 = vmul.f32 32.0, %v340
      %v342 = vsub.f32 1.0, %v341
      %v343 = vmul.f32 %v340, %v342
      %v344 = vadd.f32 %v340, %v343
      %vm345 = vweird.f32 %v340
      %v346 = vsel %vm345, %v340, %v344
      %v347 = vmul.f32 %v318, %v346
      %v348 = vmul.f32 %v321, %v346
      %v349 = vmul.f32 %v324, %v346
      %v350 = vmul.f32 %v327, %v346
      %v351 = vmul.f32 %v330, %v346
      %v352 = vmul.f32 %v333, %v346
      %v353 = vmul.f32 %v336, %v346
      %v354 = vmul.f32 %v339, %v346
      %v355 = vsub.f32 %v307, %v347
      %v356 = vsub.f32 %v308, %v348
      %v357 = vsub.f32 %v309, %v349
      %v358 = vsub.f32 %v310, %v350
      %v359 = vsub.f32 %v311, %v351
      %v360 = vsub.f32 %v312, %v352
      %v361 = vsub.f32 %v313, %v353
      %v362 = vsub.f32 %v314, %v354
      %v363 = vmul.f32 %v355, %v355
      %v364 = vmul.f32 %v356, %v356
      %v365 = vmul.f32 %v357, %v357
      %v366 = vmul.f32 %v358, %v358
      %v367 = vmul.f32 %v359, %v359
      %v368 = vmul.f32 %v360, %v360
      %v369 = vmul.f32 %v361, %v361
      %v370 = vmul.f32 %v362, %v362
      %v371 = vsel %vm315, %v363, 0.0
      %372 = vadd.xlane.f32.xlu0 %v371
      %v373 = vpop.xlane.xlu0 %372
      %v374 = vsel %vm315, %v364, 0.0
      %375 = vadd.xlane.f32.xlu0 %v374
      %v376 = vpop.xlane.xlu0 %375
      %v377 = vsel %vm315, %v365, 0.0
      %378 = vadd.xlane.f32.xlu0 %v377
      %v379 = vpop.xlane.xlu0 %378
      %v380 = vsel %vm315, %v366, 0.0
      %381 = vadd.xlane.f32.xlu0 %v380
      %v382 = vpop.xlane.xlu0 %381
      %v383 = vsel %vm315, %v367, 0.0
      %384 = vadd.xlane.f32.xlu0 %v383
      %v385 = vpop.xlane.xlu0 %384
      %v386 = vsel %vm315, %v368, 0.0
      %387 = vadd.xlane.f32.xlu0 %v386
      %v388 = vpop.xlane.xlu0 %387
      %v389 = vsel %vm315, %v369, 0.0
      %390 = vadd.xlane.f32.xlu0 %v389
      %v391 = vpop.xlane.xlu0 %390
      %v392 = vsel %vm315, %v370, 0.0
      %393 = vadd.xlane.f32.xlu0 %v392
      %v394 = vpop.xlane.xlu0 %393
      %v395 = vmul.f32 %v373, %v346
      %v396 = vmul.f32 %v376, %v346
      %v397 = vmul.f32 %v379, %v346
      %v398 = vmul.f32 %v382, %v346
      %v399 = vmul.f32 %v385, %v346
      %v400 = vmul.f32 %v388, %v346
      %v401 = vmul.f32 %v391, %v346
      %v402 = vmul.f32 %v394, %v346
      %v403 = vadd.f32 %v395, 1e-05
      %v404 = vadd.f32 %v396, 1e-05
      %v405 = vadd.f32 %v397, 1e-05
      %v406 = vadd.f32 %v398, 1e-05
      %v407 = vadd.f32 %v399, 1e-05
      %v408 = vadd.f32 %v400, 1e-05
      %v409 = vadd.f32 %v401, 1e-05
      %v410 = vadd.f32 %v402, 1e-05
      %v411 = vrsqrt.pop %v403
      %v412 = vmul.f32 %v411, %v403
      %v413 = vmul.f32 %v412, %v411
      %v414 = vmul.f32 0.5, %v413
      %v415 = vsub.f32 1.5, %v414
      %v416 = vmul.f32 %v411, %v415
      %vm417 = vweird.f32 %v403
      %vm418 = vweird.f32 %v411
      %vm419 = vmor %vm417, %vm418
      %v420 = vsel %vm419, %v411, %v416
      %v421 = vrsqrt.pop %v404
      %v422 = vmul.f32 %v421, %v404
      %v423 = vmul.f32 %v422, %v421
      %v424 = vmul.f32 0.5, %v423
      %v425 = vsub.f32 1.5, %v424
      %v426 = vmul.f32 %v421, %v425
      %vm427 = vweird.f32 %v404
      %vm428 = vweird.f32 %v421
      %vm429 = vmor %vm427, %vm428
      %v430 = vsel %vm429, %v421, %v426
      %v431 = vrsqrt.pop %v405
      %v432 = vmul.f32 %v431, %v405
      %v433 = vmul.f32 %v432, %v431
      %v434 = vmul.f32 0.5, %v433
      %v435 = vsub.f32 1.5, %v434
      %v436 = vmul.f32 %v431, %v435
      %vm437 = vweird.f32 %v405
      %vm438 = vweird.f32 %v431
      %vm439 = vmor %vm437, %vm438
      %v440 = vsel %vm439, %v431, %v436
      %v441 = vrsqrt.pop %v406
      %v442 = vmul.f32 %v441, %v406
      %v443 = vmul.f32 %v442, %v441
      %v444 = vmul.f32 0.5, %v443
      %v445 = vsub.f32 1.5, %v444
      %v446 = vmul.f32 %v441, %v445
      %vm447 = vweird.f32 %v406
      %vm448 = vweird.f32 %v441
      %vm449 = vmor %vm447, %vm448
      %v450 = vsel %vm449, %v441, %v446
      %v451 = vrsqrt.pop %v407
      %v452 = vmul.f32 %v451, %v407
      %v453 = vmul.f32 %v452, %v451
      %v454 = vmul.f32 0.5, %v453
      %v455 = vsub.f32 1.5, %v454
      %v456 = vmul.f32 %v451, %v455
      %vm457 = vweird.f32 %v407
      %vm458 = vweird.f32 %v451
      %vm459 = vmor %vm457, %vm458
      %v460 = vsel %vm459, %v451, %v456
      %v461 = vrsqrt.pop %v408
      %v462 = vmul.f32 %v461, %v408
      %v463 = vmul.f32 %v462, %v461
      %v464 = vmul.f32 0.5, %v463
      %v465 = vsub.f32 1.5, %v464
      %v466 = vmul.f32 %v461, %v465
      %vm467 = vweird.f32 %v408
      %vm468 = vweird.f32 %v461
      %vm469 = vmor %vm467, %vm468
      %v470 = vsel %vm469, %v461, %v466
      %v471 = vrsqrt.pop %v409
      %v472 = vmul.f32 %v471, %v409
      %v473 = vmul.f32 %v472, %v471
      %v474 = vmul.f32 0.5, %v473
      %v475 = vsub.f32 1.5, %v474
      %v476 = vmul.f32 %v471, %v475
      %vm477 = vweird.f32 %v409
      %vm478 = vweird.f32 %v471
      %vm479 = vmor %vm477, %vm478
      %v480 = vsel %vm479, %v471, %v476
      %v481 = vrsqrt.pop %v410
      %v482 = vmul.f32 %v481, %v410
      %v483 = vmul.f32 %v482, %v481
      %v484 = vmul.f32 0.5, %v483
      %v485 = vsub.f32 1.5, %v484
      %v486 = vmul.f32 %v481, %v485
      %vm487 = vweird.f32 %v410
      %vm488 = vweird.f32 %v481
      %vm489 = vmor %vm487, %vm488
      %v490 = vsel %vm489, %v481, %v486
      %v491 = vmul.f32 %v355, %v420
      %v492 = vmul.f32 %v356, %v430
      %v493 = vmul.f32 %v357, %v440
      %v494 = vmul.f32 %v358, %v450
      %v495 = vmul.f32 %v359, %v460
      %v496 = vmul.f32 %v360, %v470
      %v497 = vmul.f32 %v361, %v480
      %v498 = vmul.f32 %v362, %v490
      %v499 = vld [vmem:[%s1] sm:$0x1]
      %v501 = vperm.slane %v499, 0
      %v503 = vmul.f32 %v491, %v501
      %v504 = vmul.f32 %v492, %v501
      %v505 = vmul.f32 %v493, %v501
      %v506 = vmul.f32 %v494, %v501
      %v507 = vmul.f32 %v495, %v501
      %v508 = vmul.f32 %v496, %v501
      %v509 = vmul.f32 %v497, %v501
      %v510 = vmul.f32 %v498, %v501
      %v511 = vld [vmem:[%s2] sm:$0x1]
      %v513 = vperm.slane %v511, 0
      %v515 = vadd.f32 %v503, %v513
      %v516 = vadd.f32 %v504, %v513
      %v517 = vadd.f32 %v505, %v513
      %v518 = vadd.f32 %v506, %v513
      %v519 = vadd.f32 %v507, %v513
      %v520 = vadd.f32 %v508, %v513
      %v521 = vadd.f32 %v509, %v513
      %v522 = vadd.f32 %v510, %v513
      %v523 = vpack.c.bf16 %v516, %v515
      %v524 = vpack.c.bf16 %v518, %v517
      %v525 = vpack.c.bf16 %v520, %v519
      %v526 = vpack.c.bf16 %v522, %v521
      %v527 = vld [vmem:[%s3] sm:$0xff]
      %v528 = vld [vmem:[%s3 + $0x8] sm:$0xff]
      %v529 = vld [vmem:[%s3 + $0x10] sm:$0xff]
      %v530 = vld [vmem:[%s3 + $0x18] sm:$0xff]
      %v531 = vpack.c.bf16 %v528, %v527
      %v532 = vpack.c.bf16 %v530, %v529
      %v533 = vld [vmem:[%s4] sm:$0x1]
      %v535 = vperm.slane %v533, 0
      %v538 = vsel %vm315, %v523, 0
      %v541 = vsel %vm315, %v524, 0
      %v544 = vsel %vm315, %v525, 0
      %v547 = vsel %vm315, %v526, 0
      %549 = vmatpush.bf16.msra.mxu0 0
      %550 = vmatpush.bf16.msra.mxu0 0
      %551 = vmatpush.bf16.msra.mxu0 0
      %552 = vmatpush.bf16.msra.mxu0 0
      %553 = vmatpush.bf16.msra.mxu0 0
      %554 = vmatpush.bf16.msra.mxu0 0
      %555 = vmatpush.bf16.msra.mxu0 %v532
      %556 = vmatpush.bf16.msra.mxu0 %v531
      %557 = vmatmul.bf16.gmra.mxu0 %v538
      %v558 = vpop.f32.mrf.mxu0
      %v559 = vadd.f32 %v535, %v558
      %v560 = vpop.f32.mrf.mxu0
      %v561 = vadd.f32 %v535, %v560
      %562 = vmatmul.bf16.gmra.mxu0 %v541
      %v563 = vpop.f32.mrf.mxu0
      %v564 = vadd.f32 %v535, %v563
      %v565 = vpop.f32.mrf.mxu0
      %v566 = vadd.f32 %v535, %v565
      %567 = vmatmul.bf16.gmra.mxu0 %v544
      %v568 = vpop.f32.mrf.mxu0
      %v569 = vadd.f32 %v535, %v568
      %v570 = vpop.f32.mrf.mxu0
      %v571 = vadd.f32 %v535, %v570
      %572 = vmatmul.bf16.gmra.mxu0 %v547
      %v573 = vpop.f32.mrf.mxu0
      %v574 = vadd.f32 %v535, %v573
      %v575 = vpop.f32.mrf.mxu0
      %v576 = vadd.f32 %v535, %v575
      %577 = vdwg.mxu0
      %v578 = vpack.c.bf16 %v561, %v559
      %v579 = vpack.c.bf16 %v566, %v564
      %v580 = vpack.c.bf16 %v571, %v569
      %v581 = vpack.c.bf16 %v576, %v574
      %586 = vrot.lane.b32.xlu0 %v578, 96
      %v587 = vpop.permute.xlu0 %586
      %588 = vrot.lane.b32.xlu0 %v579, 96
      %v589 = vpop.permute.xlu0 %588
      %590 = vrot.lane.b32.xlu0 %v580, 96
      %v591 = vpop.permute.xlu0 %590
      %592 = vrot.lane.b32.xlu0 %v581, 96
      %v593 = vpop.permute.xlu0 %592
      %vm594 = vcmask 130048
      %v596 = vsel %vm594, %v578, 0
      %v599 = vsel %vm594, %v579, 0
      %v602 = vsel %vm594, %v580, 0
      %v605 = vsel %vm594, %v581, 0
      %v608 = vsel %vm594, %v587, 0
      %v611 = vsel %vm594, %v589, 0
      %v614 = vsel %vm594, %v591, 0
      %v617 = vsel %vm594, %v593, 0
      %619 = vmatpush.bf16.xpose.msra.mxu0 0
      %620 = vmatpush.bf16.xpose.msra.mxu0 0
      %621 = vmatpush.bf16.xpose.msra.mxu0 0
      %622 = vmatpush.bf16.xpose.msra.mxu0 0
      %623 = vmatpush.bf16.xpose.msra.mxu0 %v617
      %624 = vmatpush.bf16.xpose.msra.mxu0 %v614
      %625 = vmatpush.bf16.xpose.msra.mxu0 %v611
      %626 = vmatpush.bf16.xpose.msra.mxu0 %v608
      %627 = vmatmul.bf16.gmra.mxu0 %v596
      %v628 = vpop.f32.mrf.mxu0
      %v629 = vadd.f32 0.0, %v628
      %v630 = vpop.f32.mrf.mxu0
      %v631 = vadd.f32 0.0, %v630
      %632 = vmatmul.bf16.gmra.mxu0 %v599
      %v633 = vpop.f32.mrf.mxu0
      %v634 = vadd.f32 0.0, %v633
      %v635 = vpop.f32.mrf.mxu0
      %v636 = vadd.f32 0.0, %v635
      %637 = vmatmul.bf16.gmra.mxu0 %v602
      %v638 = vpop.f32.mrf.mxu0
      %v639 = vadd.f32 0.0, %v638
      %v640 = vpop.f32.mrf.mxu0
      %v641 = vadd.f32 0.0, %v640
      %642 = vmatmul.bf16.gmra.mxu0 %v605
      %v643 = vpop.f32.mrf.mxu0
      %v644 = vadd.f32 0.0, %v643
      %v645 = vpop.f32.mrf.mxu0
      %v646 = vadd.f32 0.0, %v645
      %647 = vdwg.mxu0
      %v648 = vmul.f32 %v629, 0.25
      %v649 = vmul.f32 %v631, 0.25
      %v650 = vmul.f32 %v634, 0.25
      %v651 = vmul.f32 %v636, 0.25
      %v652 = vmul.f32 %v639, 0.25
      %v653 = vmul.f32 %v641, 0.25
      %v654 = vmul.f32 %v644, 0.25
      %v655 = vmul.f32 %v646, 0.25
      %vm656 = vcmask 523264
      %v657 = vsel %vm656, %v648, -inf
      %658 = vmax.xlane.f32.xlu0 %v657
      %v659 = vpop.xlane.xlu0 %658
      %v660 = vsel %vm656, %v649, -inf
      %661 = vmax.xlane.f32.xlu0 %v660
      %v662 = vpop.xlane.xlu0 %661
      %v663 = vsel %vm656, %v650, -inf
      %664 = vmax.xlane.f32.xlu0 %v663
      %v665 = vpop.xlane.xlu0 %664
      %v666 = vsel %vm656, %v651, -inf
      %667 = vmax.xlane.f32.xlu0 %v666
      %v668 = vpop.xlane.xlu0 %667
      %v669 = vsel %vm656, %v652, -inf
      %670 = vmax.xlane.f32.xlu0 %v669
      %v671 = vpop.xlane.xlu0 %670
      %v672 = vsel %vm656, %v653, -inf
      %673 = vmax.xlane.f32.xlu0 %v672
      %v674 = vpop.xlane.xlu0 %673
      %v675 = vsel %vm656, %v654, -inf
      %676 = vmax.xlane.f32.xlu0 %v675
      %v677 = vpop.xlane.xlu0 %676
      %v678 = vsel %vm656, %v655, -inf
      %679 = vmax.xlane.f32.xlu0 %v678
      %v680 = vpop.xlane.xlu0 %679
      %v681 = vsub.f32 %v648, %v659
      %v682 = vsub.f32 %v649, %v662
      %v683 = vsub.f32 %v650, %v665
      %v684 = vsub.f32 %v651, %v668
      %v685 = vsub.f32 %v652, %v671
      %v686 = vsub.f32 %v653, %v674
      %v687 = vsub.f32 %v654, %v677
      %v688 = vsub.f32 %v655, %v680
      %v689 = vmul.f32 %v681, 1.442695
      %v690 = vpow.pop %v689
      %v691 = vmul.f32 %v682, 1.442695
      %v692 = vpow.pop %v691
      %v693 = vmul.f32 %v683, 1.442695
      %v694 = vpow.pop %v693
      %v695 = vmul.f32 %v684, 1.442695
      %v696 = vpow.pop %v695
      %v697 = vmul.f32 %v685, 1.442695
      %v698 = vpow.pop %v697
      %v699 = vmul.f32 %v686, 1.442695
      %v700 = vpow.pop %v699
      %v701 = vmul.f32 %v687, 1.442695
      %v702 = vpow.pop %v701
      %v703 = vmul.f32 %v688, 1.442695
      %v704 = vpow.pop %v703
      %v705 = vsel %vm656, %v690, 0.0
      %706 = vadd.xlane.f32.xlu0 %v705
      %v707 = vpop.xlane.xlu0 %706
      %v708 = vsel %vm656, %v692, 0.0
      %709 = vadd.xlane.f32.xlu0 %v708
      %v710 = vpop.xlane.xlu0 %709
      %v711 = vsel %vm656, %v694, 0.0
      %712 = vadd.xlane.f32.xlu0 %v711
      %v713 = vpop.xlane.xlu0 %712
      %v714 = vsel %vm656, %v696, 0.0
      %715 = vadd.xlane.f32.xlu0 %v714
      %v716 = vpop.xlane.xlu0 %715
      %v717 = vsel %vm656, %v698, 0.0
      %718 = vadd.xlane.f32.xlu0 %v717
      %v719 = vpop.xlane.xlu0 %718
      %v720 = vsel %vm656, %v700, 0.0
      %721 = vadd.xlane.f32.xlu0 %v720
      %v722 = vpop.xlane.xlu0 %721
      %v723 = vsel %vm656, %v702, 0.0
      %724 = vadd.xlane.f32.xlu0 %v723
      %v725 = vpop.xlane.xlu0 %724
      %v726 = vsel %vm656, %v704, 0.0
      %727 = vadd.xlane.f32.xlu0 %v726
      %v728 = vpop.xlane.xlu0 %727
      %v729 = vrcp.pop %v707
      %v730 = vrcp.pop %v710
      %v731 = vrcp.pop %v713
      %v732 = vrcp.pop %v716
      %v733 = vrcp.pop %v719
      %v734 = vrcp.pop %v722
      %v735 = vrcp.pop %v725
      %v736 = vrcp.pop %v728
      %v737 = vmul.f32 %v690, %v729
      %v738 = vmul.f32 %v692, %v730
      %v739 = vmul.f32 %v694, %v731
      %v740 = vmul.f32 %v696, %v732
      %v741 = vmul.f32 %v698, %v733
      %v742 = vmul.f32 %v700, %v734
      %v743 = vmul.f32 %v702, %v735
      %v744 = vmul.f32 %v704, %v736
      %v745 = vpack.c.bf16 %v738, %v737
      %v746 = vpack.c.bf16 %v740, %v739
      %v747 = vpack.c.bf16 %v742, %v741
      %v748 = vpack.c.bf16 %v744, %v743
      %749 = vrot.lane.b32.xlu0 %v578, 64
      %v750 = vpop.permute.xlu0 %749
      %751 = vrot.lane.b32.xlu0 %v579, 64
      %v752 = vpop.permute.xlu0 %751
      %753 = vrot.lane.b32.xlu0 %v580, 64
      %v754 = vpop.permute.xlu0 %753
      %755 = vrot.lane.b32.xlu0 %v581, 64
      %v756 = vpop.permute.xlu0 %755
      %v762 = vsel %vm656, %v745, 0
      %v765 = vsel %vm656, %v746, 0
      %v768 = vsel %vm656, %v747, 0
      %v771 = vsel %vm656, %v748, 0
      %773 = vmatpush.bf16.msra.mxu0 0
      %774 = vmatpush.bf16.msra.mxu0 0
      %775 = vmatpush.bf16.msra.mxu0 0
      %776 = vmatpush.bf16.msra.mxu0 0
      %777 = vmatpush.bf16.msra.mxu0 %v756
      %778 = vmatpush.bf16.msra.mxu0 %v754
      %779 = vmatpush.bf16.msra.mxu0 %v752
      %780 = vmatpush.bf16.msra.mxu0 %v750
      %781 = vmatmul.bf16.gmra.mxu0 %v762
      %v782 = vpop.f32.mrf.mxu0
      %v783 = vadd.f32 0.0, %v782
      %v784 = vpop.f32.mrf.mxu0
      %v785 = vadd.f32 0.0, %v784
      %786 = vmatmul.bf16.gmra.mxu0 %v765
      %v787 = vpop.f32.mrf.mxu0
      %v788 = vadd.f32 0.0, %v787
      %v789 = vpop.f32.mrf.mxu0
      %v790 = vadd.f32 0.0, %v789
      %791 = vmatmul.bf16.gmra.mxu0 %v768
      %v792 = vpop.f32.mrf.mxu0
      %v793 = vadd.f32 0.0, %v792
      %v794 = vpop.f32.mrf.mxu0
      %v795 = vadd.f32 0.0, %v794
      %796 = vmatmul.bf16.gmra.mxu0 %v771
      %v797 = vpop.f32.mrf.mxu0
      %v798 = vadd.f32 0.0, %v797
      %v799 = vpop.f32.mrf.mxu0
      %v800 = vadd.f32 0.0, %v799
      %801 = vdwg.mxu0
      %802 = vrot.lane.b32.xlu0 %v578, 112
      %v803 = vpop.permute.xlu0 %802
      %804 = vrot.lane.b32.xlu0 %v579, 112
      %v805 = vpop.permute.xlu0 %804
      %806 = vrot.lane.b32.xlu0 %v580, 112
      %v807 = vpop.permute.xlu0 %806
      %808 = vrot.lane.b32.xlu0 %v581, 112
      %v809 = vpop.permute.xlu0 %808
      %810 = vrot.lane.b32.xlu0 %v578, 80
      %v811 = vpop.permute.xlu0 %810
      %812 = vrot.lane.b32.xlu0 %v579, 80
      %v813 = vpop.permute.xlu0 %812
      %814 = vrot.lane.b32.xlu0 %v580, 80
      %v815 = vpop.permute.xlu0 %814
      %816 = vrot.lane.b32.xlu0 %v581, 80
      %v817 = vpop.permute.xlu0 %816
      %v819 = vsel %vm594, %v803, 0
      %v822 = vsel %vm594, %v805, 0
      %v825 = vsel %vm594, %v807, 0
      %v828 = vsel %vm594, %v809, 0
      %v831 = vsel %vm594, %v811, 0
      %v834 = vsel %vm594, %v813, 0
      %v837 = vsel %vm594, %v815, 0
      %v840 = vsel %vm594, %v817, 0
      %842 = vmatpush.bf16.xpose.msra.mxu0 0
      %843 = vmatpush.bf16.xpose.msra.mxu0 0
      %844 = vmatpush.bf16.xpose.msra.mxu0 0
      %845 = vmatpush.bf16.xpose.msra.mxu0 0
      %846 = vmatpush.bf16.xpose.msra.mxu0 %v840
      %847 = vmatpush.bf16.xpose.msra.mxu0 %v837
      %848 = vmatpush.bf16.xpose.msra.mxu0 %v834
      %849 = vmatpush.bf16.xpose.msra.mxu0 %v831
      %850 = vmatmul.bf16.gmra.mxu0 %v819
      %v851 = vpop.f32.mrf.mxu0
      %v852 = vadd.f32 0.0, %v851
      %v853 = vpop.f32.mrf.mxu0
      %v854 = vadd.f32 0.0, %v853
      %855 = vmatmul.bf16.gmra.mxu0 %v822
      %v856 = vpop.f32.mrf.mxu0
      %v857 = vadd.f32 0.0, %v856
      %v858 = vpop.f32.mrf.mxu0
      %v859 = vadd.f32 0.0, %v858
      %860 = vmatmul.bf16.gmra.mxu0 %v825
      %v861 = vpop.f32.mrf.mxu0
      %v862 = vadd.f32 0.0, %v861
      %v863 = vpop.f32.mrf.mxu0
      %v864 = vadd.f32 0.0, %v863
      %865 = vmatmul.bf16.gmra.mxu0 %v828
      %v866 = vpop.f32.mrf.mxu0
      %v867 = vadd.f32 0.0, %v866
      %v868 = vpop.f32.mrf.mxu0
      %v869 = vadd.f32 0.0, %v868
      %870 = vdwg.mxu0
      %v871 = vmul.f32 %v852, 0.25
      %v872 = vmul.f32 %v854, 0.25
      %v873 = vmul.f32 %v857, 0.25
      %v874 = vmul.f32 %v859, 0.25
      %v875 = vmul.f32 %v862, 0.25
      %v876 = vmul.f32 %v864, 0.25
      %v877 = vmul.f32 %v867, 0.25
      %v878 = vmul.f32 %v869, 0.25
      %v879 = vsel %vm656, %v871, -inf
      %880 = vmax.xlane.f32.xlu0 %v879
      %v881 = vpop.xlane.xlu0 %880
      %v882 = vsel %vm656, %v872, -inf
      %883 = vmax.xlane.f32.xlu0 %v882
      %v884 = vpop.xlane.xlu0 %883
      %v885 = vsel %vm656, %v873, -inf
      %886 = vmax.xlane.f32.xlu0 %v885
      %v887 = vpop.xlane.xlu0 %886
      %v888 = vsel %vm656, %v874, -inf
      %889 = vmax.xlane.f32.xlu0 %v888
      %v890 = vpop.xlane.xlu0 %889
      %v891 = vsel %vm656, %v875, -inf
      %892 = vmax.xlane.f32.xlu0 %v891
      %v893 = vpop.xlane.xlu0 %892
      %v894 = vsel %vm656, %v876, -inf
      %895 = vmax.xlane.f32.xlu0 %v894
      %v896 = vpop.xlane.xlu0 %895
      %v897 = vsel %vm656, %v877, -inf
      %898 = vmax.xlane.f32.xlu0 %v897
      %v899 = vpop.xlane.xlu0 %898
      %v900 = vsel %vm656, %v878, -inf
      %901 = vmax.xlane.f32.xlu0 %v900
      %v902 = vpop.xlane.xlu0 %901
      %v903 = vsub.f32 %v871, %v881
      %v904 = vsub.f32 %v872, %v884
      %v905 = vsub.f32 %v873, %v887
      %v906 = vsub.f32 %v874, %v890
      %v907 = vsub.f32 %v875, %v893
      %v908 = vsub.f32 %v876, %v896
      %v909 = vsub.f32 %v877, %v899
      %v910 = vsub.f32 %v878, %v902
      %v911 = vmul.f32 %v903, 1.442695
      %v912 = vpow.pop %v911
      %v913 = vmul.f32 %v904, 1.442695
      %v914 = vpow.pop %v913
      %v915 = vmul.f32 %v905, 1.442695
      %v916 = vpow.pop %v915
      %v917 = vmul.f32 %v906, 1.442695
      %v918 = vpow.pop %v917
      %v919 = vmul.f32 %v907, 1.442695
      %v920 = vpow.pop %v919
      %v921 = vmul.f32 %v908, 1.442695
      %v922 = vpow.pop %v921
      %v923 = vmul.f32 %v909, 1.442695
      %v924 = vpow.pop %v923
      %v925 = vmul.f32 %v910, 1.442695
      %v926 = vpow.pop %v925
      %v927 = vsel %vm656, %v912, 0.0
      %928 = vadd.xlane.f32.xlu0 %v927
      %v929 = vpop.xlane.xlu0 %928
      %v930 = vsel %vm656, %v914, 0.0
      %931 = vadd.xlane.f32.xlu0 %v930
      %v932 = vpop.xlane.xlu0 %931
      %v933 = vsel %vm656, %v916, 0.0
      %934 = vadd.xlane.f32.xlu0 %v933
      %v935 = vpop.xlane.xlu0 %934
      %v936 = vsel %vm656, %v918, 0.0
      %937 = vadd.xlane.f32.xlu0 %v936
      %v938 = vpop.xlane.xlu0 %937
      %v939 = vsel %vm656, %v920, 0.0
      %940 = vadd.xlane.f32.xlu0 %v939
      %v941 = vpop.xlane.xlu0 %940
      %v942 = vsel %vm656, %v922, 0.0
      %943 = vadd.xlane.f32.xlu0 %v942
      %v944 = vpop.xlane.xlu0 %943
      %v945 = vsel %vm656, %v924, 0.0
      %946 = vadd.xlane.f32.xlu0 %v945
      %v947 = vpop.xlane.xlu0 %946
      %v948 = vsel %vm656, %v926, 0.0
      %949 = vadd.xlane.f32.xlu0 %v948
      %v950 = vpop.xlane.xlu0 %949
      %v951 = vrcp.pop %v929
      %v952 = vrcp.pop %v932
      %v953 = vrcp.pop %v935
      %v954 = vrcp.pop %v938
      %v955 = vrcp.pop %v941
      %v956 = vrcp.pop %v944
      %v957 = vrcp.pop %v947
      %v958 = vrcp.pop %v950
      %v959 = vmul.f32 %v912, %v951
      %v960 = vmul.f32 %v914, %v952
      %v961 = vmul.f32 %v916, %v953
      %v962 = vmul.f32 %v918, %v954
      %v963 = vmul.f32 %v920, %v955
      %v964 = vmul.f32 %v922, %v956
      %v965 = vmul.f32 %v924, %v957
      %v966 = vmul.f32 %v926, %v958
      %v967 = vpack.c.bf16 %v960, %v959
      %v968 = vpack.c.bf16 %v962, %v961
      %v969 = vpack.c.bf16 %v964, %v963
      %v970 = vpack.c.bf16 %v966, %v965
      %971 = vrot.lane.b32.xlu0 %v578, 48
      %v972 = vpop.permute.xlu0 %971
      %973 = vrot.lane.b32.xlu0 %v579, 48
      %v974 = vpop.permute.xlu0 %973
      %975 = vrot.lane.b32.xlu0 %v580, 48
      %v976 = vpop.permute.xlu0 %975
      %977 = vrot.lane.b32.xlu0 %v581, 48
      %v978 = vpop.permute.xlu0 %977
      %v984 = vsel %vm656, %v967, 0
      %v987 = vsel %vm656, %v968, 0
      %v990 = vsel %vm656, %v969, 0
      %v993 = vsel %vm656, %v970, 0
      %995 = vmatpush.bf16.msra.mxu0 0
      %996 = vmatpush.bf16.msra.mxu0 0
      %997 = vmatpush.bf16.msra.mxu0 0
      %998 = vmatpush.bf16.msra.mxu0 0
      %999 = vmatpush.bf16.msra.mxu0 %v978
      %1000 = vmatpush.bf16.msra.mxu0 %v976
      %1001 = vmatpush.bf16.msra.mxu0 %v974
      %1002 = vmatpush.bf16.msra.mxu0 %v972
      %1003 = vmatmul.bf16.gmra.mxu0 %v984
      %v1004 = vpop.f32.mrf.mxu0
      %v1005 = vadd.f32 0.0, %v1004
      %v1006 = vpop.f32.mrf.mxu0
      %v1007 = vadd.f32 0.0, %v1006
      %1008 = vmatmul.bf16.gmra.mxu0 %v987
      %v1009 = vpop.f32.mrf.mxu0
      %v1010 = vadd.f32 0.0, %v1009
      %v1011 = vpop.f32.mrf.mxu0
      %v1012 = vadd.f32 0.0, %v1011
      %1013 = vmatmul.bf16.gmra.mxu0 %v990
      %v1014 = vpop.f32.mrf.mxu0
      %v1015 = vadd.f32 0.0, %v1014
      %v1016 = vpop.f32.mrf.mxu0
      %v1017 = vadd.f32 0.0, %v1016
      %1018 = vmatmul.bf16.gmra.mxu0 %v993
      %v1019 = vpop.f32.mrf.mxu0
      %v1020 = vadd.f32 0.0, %v1019
      %v1021 = vpop.f32.mrf.mxu0
      %v1022 = vadd.f32 0.0, %v1021
      %1023 = vdwg.mxu0
      %1032 = vrot.lane.b32.xlu0 %v1005, 16
      %v1033 = vpop.permute.xlu0 %1032
      %1034 = vrot.lane.b32.xlu0 %v1007, 16
      %v1035 = vpop.permute.xlu0 %1034
      %1036 = vrot.lane.b32.xlu0 %v1010, 16
      %v1037 = vpop.permute.xlu0 %1036
      %1038 = vrot.lane.b32.xlu0 %v1012, 16
      %v1039 = vpop.permute.xlu0 %1038
      %1040 = vrot.lane.b32.xlu0 %v1015, 16
      %v1041 = vpop.permute.xlu0 %1040
      %1042 = vrot.lane.b32.xlu0 %v1017, 16
      %v1043 = vpop.permute.xlu0 %1042
      %1044 = vrot.lane.b32.xlu0 %v1020, 16
      %v1045 = vpop.permute.xlu0 %1044
      %1046 = vrot.lane.b32.xlu0 %v1022, 16
      %v1047 = vpop.permute.xlu0 %1046
      %v1056 = vsel %vm594, %v783, %v1033
      %v1057 = vsel %vm594, %v785, %v1035
      %v1058 = vsel %vm594, %v788, %v1037
      %v1059 = vsel %vm594, %v790, %v1039
      %v1060 = vsel %vm594, %v793, %v1041
      %v1061 = vsel %vm594, %v795, %v1043
      %v1062 = vsel %vm594, %v798, %v1045
      %v1063 = vsel %vm594, %v800, %v1047
      %v1064 = vld [vmem:[%s7] sm:$0x1]
      %v1066 = vperm.slane %v1064, 0
      %v1068 = vmul.f32 %v307, %v1066
      %v1069 = vmul.f32 %v308, %v1066
      %v1070 = vmul.f32 %v309, %v1066
      %v1071 = vmul.f32 %v310, %v1066
      %v1072 = vmul.f32 %v311, %v1066
      %v1073 = vmul.f32 %v312, %v1066
      %v1074 = vmul.f32 %v313, %v1066
      %v1075 = vmul.f32 %v314, %v1066
      %v1076 = vpack.c.bf16 %v1057, %v1056
      %v1077 = vpack.c.bf16 %v1059, %v1058
      %v1078 = vpack.c.bf16 %v1061, %v1060
      %v1079 = vpack.c.bf16 %v1063, %v1062
      %v1080 = vld [vmem:[%s5] sm:$0xff]
      %v1081 = vld [vmem:[%s5 + $0x8] sm:$0xff]
      %v1082 = vld [vmem:[%s5 + $0x10] sm:$0xff]
      %v1083 = vld [vmem:[%s5 + $0x18] sm:$0xff]
      %v1084 = vpack.c.bf16 %v1081, %v1080
      %v1085 = vpack.c.bf16 %v1083, %v1082
      %v1087 = vsel %vm315, %v1076, 0
      %v1090 = vsel %vm315, %v1077, 0
      %v1093 = vsel %vm315, %v1078, 0
      %v1096 = vsel %vm315, %v1079, 0
      %1098 = vmatpush.bf16.msra.mxu0 0
      %1099 = vmatpush.bf16.msra.mxu0 0
      %1100 = vmatpush.bf16.msra.mxu0 0
      %1101 = vmatpush.bf16.msra.mxu0 0
      %1102 = vmatpush.bf16.msra.mxu0 0
      %1103 = vmatpush.bf16.msra.mxu0 0
      %1104 = vmatpush.bf16.msra.mxu0 %v1085
      %1105 = vmatpush.bf16.msra.mxu0 %v1084
      %1106 = vmatmul.bf16.gmra.mxu0 %v1087
      %v1107 = vpop.f32.mrf.mxu0
      %v1108 = vadd.f32 0.0, %v1107
      %v1109 = vpop.f32.mrf.mxu0
      %v1110 = vadd.f32 0.0, %v1109
      %1111 = vmatmul.bf16.gmra.mxu0 %v1090
      %v1112 = vpop.f32.mrf.mxu0
      %v1113 = vadd.f32 0.0, %v1112
      %v1114 = vpop.f32.mrf.mxu0
      %v1115 = vadd.f32 0.0, %v1114
      %1116 = vmatmul.bf16.gmra.mxu0 %v1093
      %v1117 = vpop.f32.mrf.mxu0
      %v1118 = vadd.f32 0.0, %v1117
      %v1119 = vpop.f32.mrf.mxu0
      %v1120 = vadd.f32 0.0, %v1119
      %1121 = vmatmul.bf16.gmra.mxu0 %v1096
      %v1122 = vpop.f32.mrf.mxu0
      %v1123 = vadd.f32 0.0, %v1122
      %v1124 = vpop.f32.mrf.mxu0
      %v1125 = vadd.f32 0.0, %v1124
      %1126 = vdwg.mxu0
      %v1127 = vadd.f32 %v1068, %v1108
      %v1128 = vadd.f32 %v1069, %v1110
      %v1129 = vadd.f32 %v1070, %v1113
      %v1130 = vadd.f32 %v1071, %v1115
      %v1131 = vadd.f32 %v1072, %v1118
      %v1132 = vadd.f32 %v1073, %v1120
      %v1133 = vadd.f32 %v1074, %v1123
      %v1134 = vadd.f32 %v1075, %v1125
      %v1135 = vld [vmem:[%s6] sm:$0x1]
      %v1137 = vperm.slane %v1135, 0
      %v1139 = vadd.f32 %v1127, %v1137
      %v1140 = vadd.f32 %v1128, %v1137
      %v1141 = vadd.f32 %v1129, %v1137
      %v1142 = vadd.f32 %v1130, %v1137
      %v1143 = vadd.f32 %v1131, %v1137
      %v1144 = vadd.f32 %v1132, %v1137
      %v1145 = vadd.f32 %v1133, %v1137
      %v1146 = vadd.f32 %v1134, %v1137
      %1147 = vst.msk [vmem:[%s305] sm:$0xff] %vm315, %v1139
      %1148 = vst.msk [vmem:[%s305 + $0x8] sm:$0xff] %vm315, %v1140
      %1149 = vst.msk [vmem:[%s305 + $0x10] sm:$0xff] %vm315, %v1141
      %1150 = vst.msk [vmem:[%s305 + $0x18] sm:$0xff] %vm315, %v1142
      %1151 = vst.msk [vmem:[%s305 + $0x20] sm:$0xff] %vm315, %v1143
      %1152 = vst.msk [vmem:[%s305 + $0x28] sm:$0xff] %vm315, %v1144
      %1153 = vst.msk [vmem:[%s305 + $0x30] sm:$0xff] %vm315, %v1145
      %1154 = vst.msk [vmem:[%s305 + $0x38] sm:$0xff] %vm315, %v1146
      %p1155 = scmp.lt.s32.totalorder %s19, 1
      %s1156 = scalar_select %p1155, %s19, 1
      %s1157 = smul.addr %s1156, 8
      %s1158 = smul.addr %s1157, 8
      %s1159 = scalar_lea.vmem %s8, %s1158
      // Predicated region
      $region53: #{transformer_encoder_multiscale.2} parent=51 // pred_check
        %p1160 = pneg %p210
      $region54: #{transformer_encoder_multiscale.2} parent=51 // pred_check_branch
        %1162 = sbr.rel (%p1160) target = $region56
      $region55: #{transformer_encoder_multiscale.2} parent=51 // pred_region
        _
      $region56: #{transformer_encoder_multiscale.2} parent=51 // pred_fallthru
        _
    $region52: #{transformer_encoder_multiscale.2} parent=5 // pred_fallthru
      _
    %p1163 = scmp.le.s32.totalorder 2, %s14
    // Predicated region
    $region57: #{transformer_encoder_multiscale.2} parent=5 // pred_check
      %p1164 = pneg %p1163
    $region58: #{transformer_encoder_multiscale.2} parent=5 // pred_check_branch
      %1166 = sbr.rel (%p1164) target = $region60
    $region59: #{transformer_encoder_multiscale.2} parent=5 // pred_region
      %s1167 = ssub.s32 %s14, 2
      // Predicated region
      $region61: #{transformer_encoder_multiscale.2} parent=59 // pred_check
        %p1168 = pneg %p216
      $region62: #{transformer_encoder_multiscale.2} parent=59 // pred_check_branch
        %1170 = sbr.rel (%p1168) target = $region64
      $region63: #{transformer_encoder_multiscale.2} parent=59 // pred_region
        %p1171 = scmp.lt.s32.totalorder %s20, 1
        %s1172 = scalar_select %p1171, %s20, 1
        %s1173 = smul.addr %s1172, 8
        %s1174 = smul.addr %s1173, 8
        %s1175 = scalar_lea.vmem %s8, %s1174
      $region64: #{transformer_encoder_multiscale.2} parent=59 // pred_fallthru
        _
    $region60: #{transformer_encoder_multiscale.2} parent=5 // pred_fallthru
      _
  $region6: #{transformer_encoder_multiscale.2} parent=0 // loop_footer
    %s18 = sadd.s32 1, %s14
  $region7: #{transformer_encoder_multiscale.2} parent=0 // loop_footer_branch
    %13 = sbr.rel target = $region3
  $region8: #{transformer_encoder_multiscale.2} parent=0 // loop_exit
    _

</llo_original>
